<compile_context>
chip_gen: v6e
topology: v6e:2x2x1
jax: 0.10.0
libtpu: 0.0.40
codegen_flags: <defaults>
</compile_context>

<pallas_src>
import jax
import jax.numpy as jnp
from jax import lax
from jax.experimental import pallas as pl
from jax.experimental.pallas import tpu as pltpu

EMBED_SIZE = 64
BLOCK_SIZE = 32           # max sequence length for the causal mask
NUM_HEADS = 4
HEAD_SIZE = EMBED_SIZE // NUM_HEADS
LN_EPS = 1e-5             # PyTorch nn.LayerNorm default eps


def _layer_norm(x, gamma, beta):
    mu = jnp.mean(x, axis=-1, keepdims=True)
    xc = x - mu
    var = jnp.mean(xc * xc, axis=-1, keepdims=True)
    inv = lax.rsqrt(var + LN_EPS)
    return xc * inv * gamma + beta


def block_kernel(x_ref, g1_ref, b1_ref, wqkv_ref, wp_ref, bp_ref,
                 g2_ref, b2_ref, w1_ref, bf1_ref, w2_ref, bf2_ref, o_ref):
    x = x_ref[...]                      # (T, C) f32 (batch dim squeezed)
    T, C = x.shape

    # ---------------- ln1 ----------------
    xn = _layer_norm(x, g1_ref[...], b1_ref[...])

    # ------ fused QKV projection for all heads: (T, 3C), one MXU push ------
    qkv = jnp.dot(xn, wqkv_ref[...], preferred_element_type=jnp.float32)
    q = qkv[:, 0 * C:1 * C]             # attention scale already folded into Wq
    k = qkv[:, 1 * C:2 * C]
    v = qkv[:, 2 * C:3 * C]

    # Causal mask built once per grid step, shared across all heads.
    row = lax.broadcasted_iota(jnp.int32, (T, T), 0)
    col = lax.broadcasted_iota(jnp.int32, (T, T), 1)
    causal = col <= row

    head_outs = []
    for h in range(NUM_HEADS):          # static unroll over 4 heads
        sl = slice(h * HEAD_SIZE, (h + 1) * HEAD_SIZE)
        qh, kh, vh = q[:, sl], k[:, sl], v[:, sl]
        # scores = qh @ kh.T without materializing the transpose
        s = lax.dot_general(qh, kh, (((1,), (1,)), ((), ())),
                            preferred_element_type=jnp.float32)   # (T, T)
        s = jnp.where(causal, s, -jnp.inf)
        m = jnp.max(s, axis=-1, keepdims=True)
        p = jnp.exp(s - m)
        denom = jnp.sum(p, axis=-1, keepdims=True)
        p = p * pl.reciprocal(denom, approx=False)
        head_outs.append(jnp.dot(p, vh, preferred_element_type=jnp.float32))
    att = jnp.concatenate(head_outs, axis=-1)                      # (T, C)

    # ---------- output projection + residual ----------
    att = jnp.dot(att, wp_ref[...],
                  preferred_element_type=jnp.float32) + bp_ref[...]
    x1 = x + att

    # ---------------- ln2 + FeedForward + residual ----------------
    xn2 = _layer_norm(x1, g2_ref[...], b2_ref[...])
    h1 = jnp.dot(xn2, w1_ref[...],
                 preferred_element_type=jnp.float32) + bf1_ref[...]
    h1 = jnp.maximum(h1, 0.0)                                      # ReLU
    ff = jnp.dot(h1, w2_ref[...],
                 preferred_element_type=jnp.float32) + bf2_ref[...]

    o_ref[...] = (x1 + ff).astype(o_ref.dtype)


def block_forward(x, p):
    """x: (B, T, C) float32. p: dict of fused parameters. Returns (B, T, C)."""
    B, T, C = x.shape
    assert C == EMBED_SIZE
    assert T <= BLOCK_SIZE, "T must not exceed block_size (causal mask extent)"

    def wspec(shape):
        return pl.BlockSpec(shape, lambda b: (0,) * len(shape))

    return pl.pallas_call(
        block_kernel,
        out_shape=jax.ShapeDtypeStruct((B, T, C), x.dtype),
        grid_spec=pltpu.PrefetchScalarGridSpec(
            num_scalar_prefetch=0,
            grid=(B,),
            in_specs=[
                pl.BlockSpec((pl.Squeezed(), T, C), lambda b: (b, 0, 0)),  # x
                wspec((1, C)),            # ln1 gamma
                wspec((1, C)),            # ln1 beta
                wspec((C, 3 * C)),        # fused Wqkv (scale folded into Wq)
                wspec((C, C)),            # attention output projection W
                wspec((1, C)),            # attention output projection bias
                wspec((1, C)),            # ln2 gamma
                wspec((1, C)),            # ln2 beta
                wspec((C, 4 * C)),        # fc1 W
                wspec((1, 4 * C)),        # fc1 bias
                wspec((4 * C, C)),        # fc2 W
                wspec((1, C)),            # fc2 bias
            ],
            out_specs=pl.BlockSpec((pl.Squeezed(), T, C), lambda b: (b, 0, 0)),
        ),
        compiler_params=pltpu.CompilerParams(
            dimension_semantics=("parallel",)),
    )(x, p["g1"], p["b1"], p["wqkv"], p["wp"], p["bp"],
      p["g2"], p["b2"], p["w1"], p["bf1"], p["w2"], p["bf2"])


# ----------------------- parameters & reference -----------------------

def init_params(key):
    """Raw (per-head, unscaled) parameters matching the PyTorch module."""
    C, H, NH = EMBED_SIZE, HEAD_SIZE, NUM_HEADS
    ks = jax.random.split(key, 9)
    bc = 1.0 / (C ** 0.5)        # nn.Linear fan_in = embed_size
    b4 = 1.0 / ((4 * C) ** 0.5)  # nn.Linear fan_in = 4*embed_size
    raw = dict(
        wq=jax.random.uniform(ks[0], (NH, C, H), jnp.float32, -bc, bc),
        wk=jax.random.uniform(ks[1], (NH, C, H), jnp.float32, -bc, bc),
        wv=jax.random.uniform(ks[2], (NH, C, H), jnp.float32, -bc, bc),
        wp=jax.random.uniform(ks[3], (C, C), jnp.float32, -bc, bc),
        bp=jax.random.uniform(ks[4], (1, C), jnp.float32, -bc, bc),
        w1=jax.random.uniform(ks[5], (C, 4 * C), jnp.float32, -bc, bc),
        bf1=jax.random.uniform(ks[6], (1, 4 * C), jnp.float32, -bc, bc),
        w2=jax.random.uniform(ks[7], (4 * C, C), jnp.float32, -b4, b4),
        bf2=jax.random.uniform(ks[8], (1, C), jnp.float32, -b4, b4),
        g1=jnp.ones((1, C), jnp.float32), b1=jnp.zeros((1, C), jnp.float32),
        g2=jnp.ones((1, C), jnp.float32), b2=jnp.zeros((1, C), jnp.float32),
    )
    return raw


def fuse_params(raw):
    """Build the fused (C, 3C) QKV weight; fold 1/sqrt(H) into Wq (init-time)."""
    C, H, NH = EMBED_SIZE, HEAD_SIZE, NUM_HEADS
    scale = jnp.float32(H) ** jnp.float32(-0.5)

    def cat_heads(w):  # (NH, C, H) -> (C, NH*H), head h at columns [h*H:(h+1)*H]
        return jnp.transpose(w, (1, 0, 2)).reshape(C, NH * H)

    wqkv = jnp.concatenate(
        [cat_heads(raw["wq"] * scale), cat_heads(raw["wk"]), cat_heads(raw["wv"])],
        axis=-1)                                    # (C, 3C)
    return dict(
        g1=raw["g1"], b1=raw["b1"], wqkv=wqkv,
        wp=raw["wp"], bp=raw["bp"],
        g2=raw["g2"], b2=raw["b2"],
        w1=raw["w1"], bf1=raw["bf1"], w2=raw["w2"], bf2=raw["bf2"],
    )


def block_reference(x, raw):
    """Pure-JAX mirror of the PyTorch Block.forward (dropout p=0 -> identity)."""
    hi = lax.Precision.HIGHEST

    def ln(v, g, b):
        mu = jnp.mean(v, axis=-1, keepdims=True)
        var = jnp.mean((v - mu) ** 2, axis=-1, keepdims=True)
        return (v - mu) / jnp.sqrt(var + LN_EPS) * g + b

    T = x.shape[1]
    mask = jnp.tril(jnp.ones((T, T), dtype=bool))
    xn = ln(x, raw["g1"], raw["b1"])
    heads = []
    for h in range(NUM_HEADS):
        q = jnp.dot(xn, raw["wq"][h], precision=hi)
        k = jnp.dot(xn, raw["wk"][h], precision=hi)
        v = jnp.dot(xn, raw["wv"][h], precision=hi)
        wei = jnp.einsum("btd,bsd->bts", q, k, precision=hi) * (HEAD_SIZE ** -0.5)
        wei = jnp.where(mask, wei, -jnp.inf)
        wei = jax.nn.softmax(wei, axis=-1)
        heads.append(jnp.einsum("bts,bsd->btd", wei, v, precision=hi))
    att = jnp.concatenate(heads, axis=-1)
    att = jnp.dot(att, raw["wp"], precision=hi) + raw["bp"]
    x1 = x + att
    xn2 = ln(x1, raw["g2"], raw["b2"])
    h1 = jnp.maximum(jnp.dot(xn2, raw["w1"], precision=hi) + raw["bf1"], 0.0)
    ff = jnp.dot(h1, raw["w2"], precision=hi) + raw["bf2"]
    return x1 + ff


if __name__ == "__main__":
    key = jax.random.PRNGKey(0)
    B, T = 2, 8
    kx, kp = jax.random.split(key)
    x = jax.random.normal(kx, (B, T, EMBED_SIZE), dtype=jnp.float32)

    raw = init_params(kp)
    fused = fuse_params(raw)

    out = block_forward(x, fused)
    jax.block_until_ready(out)

    ref = block_reference(x, raw)
    assert out.shape == (B, T, EMBED_SIZE)
    max_err = float(jnp.max(jnp.abs(out - ref)))
    assert jnp.allclose(out, ref, atol=1e-4, rtol=1e-4), (
        f"mismatch vs reference, max abs err = {max_err}")
    print("KERNEL_OK")
</pallas_src>

<mosaic_0001>
module attributes {stable_mosaic.version = 11 : i64} {
  func.func @block_kernel(%arg0: i32, %arg1: memref<1x8x64xf32, #tpu.memory_space<vmem>>, %arg2: memref<1x64xf32, #tpu.memory_space<vmem>>, %arg3: memref<1x64xf32, #tpu.memory_space<vmem>>, %arg4: memref<64x192xf32, #tpu.memory_space<vmem>>, %arg5: memref<64x64xf32, #tpu.memory_space<vmem>>, %arg6: memref<1x64xf32, #tpu.memory_space<vmem>>, %arg7: memref<1x64xf32, #tpu.memory_space<vmem>>, %arg8: memref<1x64xf32, #tpu.memory_space<vmem>>, %arg9: memref<64x256xf32, #tpu.memory_space<vmem>>, %arg10: memref<1x256xf32, #tpu.memory_space<vmem>>, %arg11: memref<256x64xf32, #tpu.memory_space<vmem>>, %arg12: memref<1x64xf32, #tpu.memory_space<vmem>>, %arg13: memref<1x8x64xf32, #tpu.memory_space<vmem>>) attributes {dimension_semantics = [#tpu.dimension_semantics<parallel>], iteration_bounds = array<i64: 2>, scalar_prefetch = 0 : i64, scratch_operands = 0 : i64, tpu.core_type = #tpu.core_type<tc>, window_params = [{transform_indices = @transform_0, window_bounds = array<i64: 1, 8, 64>}, {pipeline_mode = #tpu.pipeline_mode<synchronous>, transform_indices = @transform_1, window_bounds = array<i64: 1, 64>}, {pipeline_mode = #tpu.pipeline_mode<synchronous>, transform_indices = @transform_2, window_bounds = array<i64: 1, 64>}, {pipeline_mode = #tpu.pipeline_mode<synchronous>, transform_indices = @transform_3, window_bounds = array<i64: 64, 192>}, {pipeline_mode = #tpu.pipeline_mode<synchronous>, transform_indices = @transform_4, window_bounds = array<i64: 64, 64>}, {pipeline_mode = #tpu.pipeline_mode<synchronous>, transform_indices = @transform_5, window_bounds = array<i64: 1, 64>}, {pipeline_mode = #tpu.pipeline_mode<synchronous>, transform_indices = @transform_6, window_bounds = array<i64: 1, 64>}, {pipeline_mode = #tpu.pipeline_mode<synchronous>, transform_indices = @transform_7, window_bounds = array<i64: 1, 64>}, {pipeline_mode = #tpu.pipeline_mode<synchronous>, transform_indices = @transform_8, window_bounds = array<i64: 64, 256>}, {pipeline_mode = #tpu.pipeline_mode<synchronous>, transform_indices = @transform_9, window_bounds = array<i64: 1, 256>}, {pipeline_mode = #tpu.pipeline_mode<synchronous>, transform_indices = @transform_10, window_bounds = array<i64: 256, 64>}, {pipeline_mode = #tpu.pipeline_mode<synchronous>, transform_indices = @transform_11, window_bounds = array<i64: 1, 64>}, {transform_indices = @transform_12, window_bounds = array<i64: 1, 8, 64>}]} {
    %c0 = arith.constant 0 : index
    %c0_0 = arith.constant 0 : index
    %c0_1 = arith.constant 0 : index
    %0 = vector.load %arg1[%c0, %c0_0, %c0_1] : memref<1x8x64xf32, #tpu.memory_space<vmem>>, vector<1x8x64xf32>
    %1 = vector.shape_cast %0 : vector<1x8x64xf32> to vector<8x64xf32>
    %c0_2 = arith.constant 0 : index
    %c0_3 = arith.constant 0 : index
    %2 = vector.load %arg2[%c0_2, %c0_3] : memref<1x64xf32, #tpu.memory_space<vmem>>, vector<1x64xf32>
    %c0_4 = arith.constant 0 : index
    %c0_5 = arith.constant 0 : index
    %3 = vector.load %arg3[%c0_4, %c0_5] : memref<1x64xf32, #tpu.memory_space<vmem>>, vector<1x64xf32>
    %cst = arith.constant dense<0.000000e+00> : vector<8xf32>
    %4 = vector.multi_reduction <add>, %1, %cst [1] : vector<8x64xf32> to vector<8xf32>
    %5 = vector.shape_cast %4 : vector<8xf32> to vector<8x1xf32>
    %cst_6 = arith.constant 6.400000e+01 : f32
    %6 = vector.broadcast %cst_6 : f32 to vector<8x1xf32>
    %7 = arith.divf %5, %6 : vector<8x1xf32>
    %8 = vector.broadcast %7 : vector<8x1xf32> to vector<8x64xf32>
    %9 = arith.subf %1, %8 : vector<8x64xf32>
    %10 = arith.mulf %9, %9 : vector<8x64xf32>
    %cst_7 = arith.constant dense<0.000000e+00> : vector<8xf32>
    %11 = vector.multi_reduction <add>, %10, %cst_7 [1] : vector<8x64xf32> to vector<8xf32>
    %12 = vector.shape_cast %11 : vector<8xf32> to vector<8x1xf32>
    %cst_8 = arith.constant 6.400000e+01 : f32
    %13 = vector.broadcast %cst_8 : f32 to vector<8x1xf32>
    %14 = arith.divf %12, %13 : vector<8x1xf32>
    %cst_9 = arith.constant 9.99999974E-6 : f32
    %15 = vector.broadcast %cst_9 : f32 to vector<8x1xf32>
    %16 = arith.addf %14, %15 : vector<8x1xf32>
    %17 = math.rsqrt %16 : vector<8x1xf32>
    %18 = vector.broadcast %17 : vector<8x1xf32> to vector<8x64xf32>
    %19 = arith.mulf %9, %18 : vector<8x64xf32>
    %20 = vector.broadcast %2 : vector<1x64xf32> to vector<8x64xf32>
    %21 = arith.mulf %19, %20 : vector<8x64xf32>
    %22 = vector.broadcast %3 : vector<1x64xf32> to vector<8x64xf32>
    %23 = arith.addf %21, %22 : vector<8x64xf32>
    %c0_10 = arith.constant 0 : index
    %c0_11 = arith.constant 0 : index
    %24 = vector.load %arg4[%c0_10, %c0_11] : memref<64x192xf32, #tpu.memory_space<vmem>>, vector<64x192xf32>
    %cst_12 = arith.constant dense<0.000000e+00> : vector<8x192xf32>
    %25 = tpu.matmul %23, %24, %cst_12 {dimension_numbers = #tpu.dot_dimension_numbers<[1], [0], [0], [1], [0, 0, 1, 1], [], []>} : vector<8x64xf32>, vector<64x192xf32>, vector<8x192xf32> -> vector<8x192xf32>
    %26 = vector.extract_strided_slice %25 {offsets = [0, 0], sizes = [8, 64], strides = [1, 1]} : vector<8x192xf32> to vector<8x64xf32>
    %27 = vector.extract_strided_slice %25 {offsets = [0, 64], sizes = [8, 64], strides = [1, 1]} : vector<8x192xf32> to vector<8x64xf32>
    %28 = vector.extract_strided_slice %25 {offsets = [0, 128], sizes = [8, 64], strides = [1, 1]} : vector<8x192xf32> to vector<8x64xf32>
    %29 = tpu.iota {dimensions = array<i32: 0>} : vector<8x8xi32>
    %30 = tpu.iota {dimensions = array<i32: 1>} : vector<8x8xi32>
    %31 = arith.cmpi sle, %30, %29 : vector<8x8xi32>
    %32 = vector.extract_strided_slice %26 {offsets = [0, 0], sizes = [8, 16], strides = [1, 1]} : vector<8x64xf32> to vector<8x16xf32>
    %33 = vector.extract_strided_slice %27 {offsets = [0, 0], sizes = [8, 16], strides = [1, 1]} : vector<8x64xf32> to vector<8x16xf32>
    %34 = vector.extract_strided_slice %28 {offsets = [0, 0], sizes = [8, 16], strides = [1, 1]} : vector<8x64xf32> to vector<8x16xf32>
    %cst_13 = arith.constant dense<0.000000e+00> : vector<8x8xf32>
    %35 = tpu.matmul %32, %33, %cst_13 {dimension_numbers = #tpu.dot_dimension_numbers<[1], [1], [0], [0], [0, 0, 1, 0], [], []>} : vector<8x16xf32>, vector<8x16xf32>, vector<8x8xf32> -> vector<8x8xf32>
    %cst_14 = arith.constant 0xFF800000 : f32
    %36 = vector.broadcast %cst_14 : f32 to vector<8x8xf32>
    %37 = arith.select %31, %35, %36 : vector<8x8xi1>, vector<8x8xf32>
    %cst_15 = arith.constant dense<0xFF800000> : vector<8xf32>
    %38 = vector.multi_reduction <maximumf>, %37, %cst_15 [1] : vector<8x8xf32> to vector<8xf32>
    %39 = vector.shape_cast %38 : vector<8xf32> to vector<8x1xf32>
    %40 = vector.broadcast %39 : vector<8x1xf32> to vector<8x8xf32>
    %41 = arith.subf %37, %40 : vector<8x8xf32>
    %42 = math.exp %41 : vector<8x8xf32>
    %cst_16 = arith.constant dense<0.000000e+00> : vector<8xf32>
    %43 = vector.multi_reduction <add>, %42, %cst_16 [1] : vector<8x8xf32> to vector<8xf32>
    %44 = vector.shape_cast %43 : vector<8xf32> to vector<8x1xf32>
    %45 = tpu.reciprocal %44 : vector<8x1xf32> -> vector<8x1xf32>
    %46 = vector.broadcast %45 : vector<8x1xf32> to vector<8x8xf32>
    %47 = arith.mulf %42, %46 : vector<8x8xf32>
    %cst_17 = arith.constant dense<0.000000e+00> : vector<8x16xf32>
    %48 = tpu.matmul %47, %34, %cst_17 {dimension_numbers = #tpu.dot_dimension_numbers<[1], [0], [0], [1], [0, 0, 1, 1], [], []>} : vector<8x8xf32>, vector<8x16xf32>, vector<8x16xf32> -> vector<8x16xf32>
    %49 = vector.extract_strided_slice %26 {offsets = [0, 16], sizes = [8, 16], strides = [1, 1]} : vector<8x64xf32> to vector<8x16xf32>
    %50 = vector.extract_strided_slice %27 {offsets = [0, 16], sizes = [8, 16], strides = [1, 1]} : vector<8x64xf32> to vector<8x16xf32>
    %51 = vector.extract_strided_slice %28 {offsets = [0, 16], sizes = [8, 16], strides = [1, 1]} : vector<8x64xf32> to vector<8x16xf32>
    %cst_18 = arith.constant dense<0.000000e+00> : vector<8x8xf32>
    %52 = tpu.matmul %49, %50, %cst_18 {dimension_numbers = #tpu.dot_dimension_numbers<[1], [1], [0], [0], [0, 0, 1, 0], [], []>} : vector<8x16xf32>, vector<8x16xf32>, vector<8x8xf32> -> vector<8x8xf32>
    %cst_19 = arith.constant 0xFF800000 : f32
    %53 = vector.broadcast %cst_19 : f32 to vector<8x8xf32>
    %54 = arith.select %31, %52, %53 : vector<8x8xi1>, vector<8x8xf32>
    %cst_20 = arith.constant dense<0xFF800000> : vector<8xf32>
    %55 = vector.multi_reduction <maximumf>, %54, %cst_20 [1] : vector<8x8xf32> to vector<8xf32>
    %56 = vector.shape_cast %55 : vector<8xf32> to vector<8x1xf32>
    %57 = vector.broadcast %56 : vector<8x1xf32> to vector<8x8xf32>
    %58 = arith.subf %54, %57 : vector<8x8xf32>
    %59 = math.exp %58 : vector<8x8xf32>
    %cst_21 = arith.constant dense<0.000000e+00> : vector<8xf32>
    %60 = vector.multi_reduction <add>, %59, %cst_21 [1] : vector<8x8xf32> to vector<8xf32>
    %61 = vector.shape_cast %60 : vector<8xf32> to vector<8x1xf32>
    %62 = tpu.reciprocal %61 : vector<8x1xf32> -> vector<8x1xf32>
    %63 = vector.broadcast %62 : vector<8x1xf32> to vector<8x8xf32>
    %64 = arith.mulf %59, %63 : vector<8x8xf32>
    %cst_22 = arith.constant dense<0.000000e+00> : vector<8x16xf32>
    %65 = tpu.matmul %64, %51, %cst_22 {dimension_numbers = #tpu.dot_dimension_numbers<[1], [0], [0], [1], [0, 0, 1, 1], [], []>} : vector<8x8xf32>, vector<8x16xf32>, vector<8x16xf32> -> vector<8x16xf32>
    %66 = vector.extract_strided_slice %26 {offsets = [0, 32], sizes = [8, 16], strides = [1, 1]} : vector<8x64xf32> to vector<8x16xf32>
    %67 = vector.extract_strided_slice %27 {offsets = [0, 32], sizes = [8, 16], strides = [1, 1]} : vector<8x64xf32> to vector<8x16xf32>
    %68 = vector.extract_strided_slice %28 {offsets = [0, 32], sizes = [8, 16], strides = [1, 1]} : vector<8x64xf32> to vector<8x16xf32>
    %cst_23 = arith.constant dense<0.000000e+00> : vector<8x8xf32>
    %69 = tpu.matmul %66, %67, %cst_23 {dimension_numbers = #tpu.dot_dimension_numbers<[1], [1], [0], [0], [0, 0, 1, 0], [], []>} : vector<8x16xf32>, vector<8x16xf32>, vector<8x8xf32> -> vector<8x8xf32>
    %cst_24 = arith.constant 0xFF800000 : f32
    %70 = vector.broadcast %cst_24 : f32 to vector<8x8xf32>
    %71 = arith.select %31, %69, %70 : vector<8x8xi1>, vector<8x8xf32>
    %cst_25 = arith.constant dense<0xFF800000> : vector<8xf32>
    %72 = vector.multi_reduction <maximumf>, %71, %cst_25 [1] : vector<8x8xf32> to vector<8xf32>
    %73 = vector.shape_cast %72 : vector<8xf32> to vector<8x1xf32>
    %74 = vector.broadcast %73 : vector<8x1xf32> to vector<8x8xf32>
    %75 = arith.subf %71, %74 : vector<8x8xf32>
    %76 = math.exp %75 : vector<8x8xf32>
    %cst_26 = arith.constant dense<0.000000e+00> : vector<8xf32>
    %77 = vector.multi_reduction <add>, %76, %cst_26 [1] : vector<8x8xf32> to vector<8xf32>
    %78 = vector.shape_cast %77 : vector<8xf32> to vector<8x1xf32>
    %79 = tpu.reciprocal %78 : vector<8x1xf32> -> vector<8x1xf32>
    %80 = vector.broadcast %79 : vector<8x1xf32> to vector<8x8xf32>
    %81 = arith.mulf %76, %80 : vector<8x8xf32>
    %cst_27 = arith.constant dense<0.000000e+00> : vector<8x16xf32>
    %82 = tpu.matmul %81, %68, %cst_27 {dimension_numbers = #tpu.dot_dimension_numbers<[1], [0], [0], [1], [0, 0, 1, 1], [], []>} : vector<8x8xf32>, vector<8x16xf32>, vector<8x16xf32> -> vector<8x16xf32>
    %83 = vector.extract_strided_slice %26 {offsets = [0, 48], sizes = [8, 16], strides = [1, 1]} : vector<8x64xf32> to vector<8x16xf32>
    %84 = vector.extract_strided_slice %27 {offsets = [0, 48], sizes = [8, 16], strides = [1, 1]} : vector<8x64xf32> to vector<8x16xf32>
    %85 = vector.extract_strided_slice %28 {offsets = [0, 48], sizes = [8, 16], strides = [1, 1]} : vector<8x64xf32> to vector<8x16xf32>
    %cst_28 = arith.constant dense<0.000000e+00> : vector<8x8xf32>
    %86 = tpu.matmul %83, %84, %cst_28 {dimension_numbers = #tpu.dot_dimension_numbers<[1], [1], [0], [0], [0, 0, 1, 0], [], []>} : vector<8x16xf32>, vector<8x16xf32>, vector<8x8xf32> -> vector<8x8xf32>
    %cst_29 = arith.constant 0xFF800000 : f32
    %87 = vector.broadcast %cst_29 : f32 to vector<8x8xf32>
    %88 = arith.select %31, %86, %87 : vector<8x8xi1>, vector<8x8xf32>
    %cst_30 = arith.constant dense<0xFF800000> : vector<8xf32>
    %89 = vector.multi_reduction <maximumf>, %88, %cst_30 [1] : vector<8x8xf32> to vector<8xf32>
    %90 = vector.shape_cast %89 : vector<8xf32> to vector<8x1xf32>
    %91 = vector.broadcast %90 : vector<8x1xf32> to vector<8x8xf32>
    %92 = arith.subf %88, %91 : vector<8x8xf32>
    %93 = math.exp %92 : vector<8x8xf32>
    %cst_31 = arith.constant dense<0.000000e+00> : vector<8xf32>
    %94 = vector.multi_reduction <add>, %93, %cst_31 [1] : vector<8x8xf32> to vector<8xf32>
    %95 = vector.shape_cast %94 : vector<8xf32> to vector<8x1xf32>
    %96 = tpu.reciprocal %95 : vector<8x1xf32> -> vector<8x1xf32>
    %97 = vector.broadcast %96 : vector<8x1xf32> to vector<8x8xf32>
    %98 = arith.mulf %93, %97 : vector<8x8xf32>
    %cst_32 = arith.constant dense<0.000000e+00> : vector<8x16xf32>
    %99 = tpu.matmul %98, %85, %cst_32 {dimension_numbers = #tpu.dot_dimension_numbers<[1], [0], [0], [1], [0, 0, 1, 1], [], []>} : vector<8x8xf32>, vector<8x16xf32>, vector<8x16xf32> -> vector<8x16xf32>
    %100 = tpu.concatenate %48, %65, %82, %99 in 1 : vector<8x16xf32>, vector<8x16xf32>, vector<8x16xf32>, vector<8x16xf32> -> vector<8x64xf32>
    %c0_33 = arith.constant 0 : index
    %c0_34 = arith.constant 0 : index
    %101 = vector.load %arg5[%c0_33, %c0_34] : memref<64x64xf32, #tpu.memory_space<vmem>>, vector<64x64xf32>
    %cst_35 = arith.constant dense<0.000000e+00> : vector<8x64xf32>
    %102 = tpu.matmul %100, %101, %cst_35 {dimension_numbers = #tpu.dot_dimension_numbers<[1], [0], [0], [1], [0, 0, 1, 1], [], []>} : vector<8x64xf32>, vector<64x64xf32>, vector<8x64xf32> -> vector<8x64xf32>
    %c0_36 = arith.constant 0 : index
    %c0_37 = arith.constant 0 : index
    %103 = vector.load %arg6[%c0_36, %c0_37] : memref<1x64xf32, #tpu.memory_space<vmem>>, vector<1x64xf32>
    %104 = vector.broadcast %103 : vector<1x64xf32> to vector<8x64xf32>
    %105 = arith.addf %102, %104 : vector<8x64xf32>
    %106 = arith.addf %1, %105 : vector<8x64xf32>
    %c0_38 = arith.constant 0 : index
    %c0_39 = arith.constant 0 : index
    %107 = vector.load %arg7[%c0_38, %c0_39] : memref<1x64xf32, #tpu.memory_space<vmem>>, vector<1x64xf32>
    %c0_40 = arith.constant 0 : index
    %c0_41 = arith.constant 0 : index
    %108 = vector.load %arg8[%c0_40, %c0_41] : memref<1x64xf32, #tpu.memory_space<vmem>>, vector<1x64xf32>
    %cst_42 = arith.constant dense<0.000000e+00> : vector<8xf32>
    %109 = vector.multi_reduction <add>, %106, %cst_42 [1] : vector<8x64xf32> to vector<8xf32>
    %110 = vector.shape_cast %109 : vector<8xf32> to vector<8x1xf32>
    %cst_43 = arith.constant 6.400000e+01 : f32
    %111 = vector.broadcast %cst_43 : f32 to vector<8x1xf32>
    %112 = arith.divf %110, %111 : vector<8x1xf32>
    %113 = vector.broadcast %112 : vector<8x1xf32> to vector<8x64xf32>
    %114 = arith.subf %106, %113 : vector<8x64xf32>
    %115 = arith.mulf %114, %114 : vector<8x64xf32>
    %cst_44 = arith.constant dense<0.000000e+00> : vector<8xf32>
    %116 = vector.multi_reduction <add>, %115, %cst_44 [1] : vector<8x64xf32> to vector<8xf32>
    %117 = vector.shape_cast %116 : vector<8xf32> to vector<8x1xf32>
    %cst_45 = arith.constant 6.400000e+01 : f32
    %118 = vector.broadcast %cst_45 : f32 to vector<8x1xf32>
    %119 = arith.divf %117, %118 : vector<8x1xf32>
    %cst_46 = arith.constant 9.99999974E-6 : f32
    %120 = vector.broadcast %cst_46 : f32 to vector<8x1xf32>
    %121 = arith.addf %119, %120 : vector<8x1xf32>
    %122 = math.rsqrt %121 : vector<8x1xf32>
    %123 = vector.broadcast %122 : vector<8x1xf32> to vector<8x64xf32>
    %124 = arith.mulf %114, %123 : vector<8x64xf32>
    %125 = vector.broadcast %107 : vector<1x64xf32> to vector<8x64xf32>
    %126 = arith.mulf %124, %125 : vector<8x64xf32>
    %127 = vector.broadcast %108 : vector<1x64xf32> to vector<8x64xf32>
    %128 = arith.addf %126, %127 : vector<8x64xf32>
    %c0_47 = arith.constant 0 : index
    %c0_48 = arith.constant 0 : index
    %129 = vector.load %arg9[%c0_47, %c0_48] : memref<64x256xf32, #tpu.memory_space<vmem>>, vector<64x256xf32>
    %cst_49 = arith.constant dense<0.000000e+00> : vector<8x256xf32>
    %130 = tpu.matmul %128, %129, %cst_49 {dimension_numbers = #tpu.dot_dimension_numbers<[1], [0], [0], [1], [0, 0, 1, 1], [], []>} : vector<8x64xf32>, vector<64x256xf32>, vector<8x256xf32> -> vector<8x256xf32>
    %c0_50 = arith.constant 0 : index
    %c0_51 = arith.constant 0 : index
    %131 = vector.load %arg10[%c0_50, %c0_51] : memref<1x256xf32, #tpu.memory_space<vmem>>, vector<1x256xf32>
    %132 = vector.broadcast %131 : vector<1x256xf32> to vector<8x256xf32>
    %133 = arith.addf %130, %132 : vector<8x256xf32>
    %cst_52 = arith.constant 0.000000e+00 : f32
    %134 = vector.broadcast %cst_52 : f32 to vector<8x256xf32>
    %135 = arith.maximumf %133, %134 : vector<8x256xf32>
    %c0_53 = arith.constant 0 : index
    %c0_54 = arith.constant 0 : index
    %136 = vector.load %arg11[%c0_53, %c0_54] : memref<256x64xf32, #tpu.memory_space<vmem>>, vector<256x64xf32>
    %cst_55 = arith.constant dense<0.000000e+00> : vector<8x64xf32>
    %137 = tpu.matmul %135, %136, %cst_55 {dimension_numbers = #tpu.dot_dimension_numbers<[1], [0], [0], [1], [0, 0, 1, 1], [], []>} : vector<8x256xf32>, vector<256x64xf32>, vector<8x64xf32> -> vector<8x64xf32>
    %c0_56 = arith.constant 0 : index
    %c0_57 = arith.constant 0 : index
    %138 = vector.load %arg12[%c0_56, %c0_57] : memref<1x64xf32, #tpu.memory_space<vmem>>, vector<1x64xf32>
    %139 = vector.broadcast %138 : vector<1x64xf32> to vector<8x64xf32>
    %140 = arith.addf %137, %139 : vector<8x64xf32>
    %141 = arith.addf %106, %140 : vector<8x64xf32>
    %c0_58 = arith.constant 0 : index
    %c0_59 = arith.constant 0 : index
    %c0_60 = arith.constant 0 : index
    %142 = vector.load %arg13[%c0_58, %c0_59, %c0_60] : memref<1x8x64xf32, #tpu.memory_space<vmem>>, vector<1x8x64xf32>
    %143 = vector.shape_cast %142 : vector<1x8x64xf32> to vector<8x64xf32>
    %144 = vector.shape_cast %141 : vector<8x64xf32> to vector<1x8x64xf32>
    tpu.vector_store %arg13[%c0_58, %c0_59, %c0_60], %144 {strides = array<i32>} : memref<1x8x64xf32, #tpu.memory_space<vmem>>, vector<1x8x64xf32>,
    return
  }
  func.func @transform_0(%arg0: i32) -> (i32, i32, i32) {
    %c0_i32 = arith.constant 0 : i32
    %c0_i32_0 = arith.constant 0 : i32
    %c0_i32_1 = arith.constant 0 : i32
    return %arg0, %c0_i32, %c0_i32_0 : i32, i32, i32
  }
  func.func @transform_1(%arg0: i32) -> (i32, i32) {
    %c0_i32 = arith.constant 0 : i32
    %c0_i32_0 = arith.constant 0 : i32
    %c0_i32_1 = arith.constant 0 : i32
    return %c0_i32, %c0_i32_0 : i32, i32
  }
  func.func @transform_2(%arg0: i32) -> (i32, i32) {
    %c0_i32 = arith.constant 0 : i32
    %c0_i32_0 = arith.constant 0 : i32
    %c0_i32_1 = arith.constant 0 : i32
    return %c0_i32, %c0_i32_0 : i32, i32
  }
  func.func @transform_3(%arg0: i32) -> (i32, i32) {
    %c0_i32 = arith.constant 0 : i32
    %c0_i32_0 = arith.constant 0 : i32
    %c0_i32_1 = arith.constant 0 : i32
    return %c0_i32, %c0_i32_0 : i32, i32
  }
  func.func @transform_4(%arg0: i32) -> (i32, i32) {
    %c0_i32 = arith.constant 0 : i32
    %c0_i32_0 = arith.constant 0 : i32
    %c0_i32_1 = arith.constant 0 : i32
    return %c0_i32, %c0_i32_0 : i32, i32
  }
  func.func @transform_5(%arg0: i32) -> (i32, i32) {
    %c0_i32 = arith.constant 0 : i32
    %c0_i32_0 = arith.constant 0 : i32
    %c0_i32_1 = arith.constant 0 : i32
    return %c0_i32, %c0_i32_0 : i32, i32
  }
  func.func @transform_6(%arg0: i32) -> (i32, i32) {
    %c0_i32 = arith.constant 0 : i32
    %c0_i32_0 = arith.constant 0 : i32
    %c0_i32_1 = arith.constant 0 : i32
    return %c0_i32, %c0_i32_0 : i32, i32
  }
  func.func @transform_7(%arg0: i32) -> (i32, i32) {
    %c0_i32 = arith.constant 0 : i32
    %c0_i32_0 = arith.constant 0 : i32
    %c0_i32_1 = arith.constant 0 : i32
    return %c0_i32, %c0_i32_0 : i32, i32
  }
  func.func @transform_8(%arg0: i32) -> (i32, i32) {
    %c0_i32 = arith.constant 0 : i32
    %c0_i32_0 = arith.constant 0 : i32
    %c0_i32_1 = arith.constant 0 : i32
    return %c0_i32, %c0_i32_0 : i32, i32
  }
  func.func @transform_9(%arg0: i32) -> (i32, i32) {
    %c0_i32 = arith.constant 0 : i32
    %c0_i32_0 = arith.constant 0 : i32
    %c0_i32_1 = arith.constant 0 : i32
    return %c0_i32, %c0_i32_0 : i32, i32
  }
  func.func @transform_10(%arg0: i32) -> (i32, i32) {
    %c0_i32 = arith.constant 0 : i32
    %c0_i32_0 = arith.constant 0 : i32
    %c0_i32_1 = arith.constant 0 : i32
    return %c0_i32, %c0_i32_0 : i32, i32
  }
  func.func @transform_11(%arg0: i32) -> (i32, i32) {
    %c0_i32 = arith.constant 0 : i32
    %c0_i32_0 = arith.constant 0 : i32
    %c0_i32_1 = arith.constant 0 : i32
    return %c0_i32, %c0_i32_0 : i32, i32
  }
  func.func @transform_12(%arg0: i32) -> (i32, i32, i32) {
    %c0_i32 = arith.constant 0 : i32
    %c0_i32_0 = arith.constant 0 : i32
    %c0_i32_1 = arith.constant 0 : i32
    return %arg0, %c0_i32, %c0_i32_0 : i32, i32, i32
  }
}

</mosaic_0001>

<llo_original>
// kernel: tpu_custom_call.1
$region0: #{tpu_custom_call.1}
  #allocation0 [shape = 'u32[]', space=smem, size = 0x4, offset = 0x4, fixed_abs, tag = 'smem constant byte address 0x4 - core index']
  #allocation1 [shape = 'u32[144,128]{1,0:T(1,128)}', space=vmem, size = 0x12000, scoped, tag = 'internal scratch']
  %s0 = inlined_call_operand.vmem [shape: f32[2,8,64], index: 0, kind: input, shape index: {}]
  %s1 = inlined_call_operand.vmem [shape: f32[1,64], index: 1, kind: input, shape index: {}]
  %s2 = inlined_call_operand.vmem [shape: f32[1,64], index: 2, kind: input, shape index: {}]
  %s3 = inlined_call_operand.vmem [shape: f32[64,192], index: 3, kind: input, shape index: {}]
  %s4 = inlined_call_operand.vmem [shape: f32[64,64], index: 4, kind: input, shape index: {}]
  %s5 = inlined_call_operand.vmem [shape: f32[1,64], index: 5, kind: input, shape index: {}]
  %s6 = inlined_call_operand.vmem [shape: f32[1,64], index: 6, kind: input, shape index: {}]
  %s7 = inlined_call_operand.vmem [shape: f32[1,64], index: 7, kind: input, shape index: {}]
  %s8 = inlined_call_operand.vmem [shape: f32[64,256], index: 8, kind: input, shape index: {}]
  %s9 = inlined_call_operand.vmem [shape: f32[1,256], index: 9, kind: input, shape index: {}]
  %s10 = inlined_call_operand.vmem [shape: f32[256,64], index: 10, kind: input, shape index: {}]
  %s11 = inlined_call_operand.vmem [shape: f32[1,64], index: 11, kind: input, shape index: {}]
  %s12 = inlined_call_operand.hbm [shape: f32[2,8,64], index: 12, kind: output, shape index: {}]
  %s13 = sld [smem:[#allocation0]]
  $region81: #{tpu_custom_call.1} parent=0
    _
  %s15 = ssub.s32 1, %s13
  %s16 = scalar_select 0, %s15, %s13
  $region1: #{tpu_custom_call.1} parent=0
    #allocation2 [shape = 'u8[8192]{0}', space=vmem, size = 0x2000, scoped, tag = 'output window, operand 0']
    #allocation3 [shape = 's32[2]{0}', space=sflag, size = 0x8, scoped, tag = 'scoped memory for tpu_custom_call.1']
    %17 = vsyncpa [#allocation3], 0
    %s18 = scalar_lea.sflag [#allocation3], 1
    %19 = vsyncpa %s18, 0
    loop: start=0, step=1, limit=4
    $region2: #{tpu_custom_call.1} parent=1 // loop_pre_header
      _
    $region3: #{tpu_custom_call.1} parent=1 // loop_header
      %s21 = sphi 0, %s25
      %p22 = scmp.ge.s32.totalorder %s21, 4
      %s31 = sphi 0, %s33
      %s34 = sphi 0, %s31
      %s35 = sphi 0, %s34
      %s51 = sphi 0, %s35
      %s55 = sphi 0, %s55
      %s57 = sphi 0, %s55
      %s58 = sphi 0, %s57
      %s72 = sphi 0, %s58
      %s76 = sphi 0, %s76
      %s78 = sphi 0, %s76
      %s79 = sphi 0, %s78
      %s93 = sphi 0, %s79
      %s97 = sphi 0, %s97
      %s99 = sphi 0, %s97
      %s100 = sphi 0, %s99
      %s114 = sphi 0, %s100
      %s118 = sphi 0, %s118
      %s120 = sphi 0, %s118
      %s121 = sphi 0, %s120
      %s135 = sphi 0, %s121
      %s139 = sphi 0, %s139
      %s141 = sphi 0, %s139
      %s142 = sphi 0, %s141
      %s156 = sphi 0, %s142
      %s160 = sphi 0, %s160
      %s162 = sphi 0, %s160
      %s163 = sphi 0, %s162
      %s177 = sphi 0, %s163
      %s181 = sphi 0, %s181
      %s183 = sphi 0, %s181
      %s184 = sphi 0, %s183
      %s198 = sphi 0, %s184
      %s202 = sphi 0, %s202
      %s204 = sphi 0, %s202
      %s205 = sphi 0, %s204
      %s219 = sphi 0, %s205
      %s223 = sphi 0, %s223
      %s225 = sphi 0, %s223
      %s226 = sphi 0, %s225
      %s240 = sphi 0, %s226
      %s244 = sphi 0, %s244
      %s246 = sphi 0, %s244
      %s247 = sphi 0, %s246
      %s261 = sphi 0, %s247
      %s265 = sphi 0, %s265
      %s267 = sphi 0, %s265
      %s268 = sphi 0, %s267
      %s282 = sphi 0, %s268
      %s288 = sphi 0, %s290
      %s291 = sphi 0, %s288
      %s292 = sphi 0, %s291
      %s308 = sphi 0, %s292
    $region4: #{tpu_custom_call.1} parent=1 // loop_header_branch
      %24 = sbr.rel (%p22) target = $region8
    $region5: #{tpu_custom_call.1} parent=1 // loop_body
      %s26 = ssub.s32 %s21, 1
      %s27 = ssub.s32 %s21, 2
      %s28 = sadd.s32 %s21, 1
      %s29 = ssub.s32 %s21, %s28
      %p30 = scmp.eq.s32.totalorder %s29, 0
      %s32 = sadd.s32 %s31, 1
      %s33 = scalar_select %p30, %s31, %s32
      %p36 = pneg %p30
      %p37 = scmp.eq.s32.totalorder %s21, 1
      %p38 = por %p36, %p37
      %p39 = scmp.ne.s32.totalorder %s31, %s34
      %p40 = scmp.eq.s32.totalorder %s21, 0
      %p41 = por %p39, %p40
      %p42 = scmp.ne.s32.totalorder %s31, %s34
      %p43 = scmp.eq.s32.totalorder %s26, 1
      %p44 = por %p42, %p43
      %p45 = scmp.ne.s32.totalorder %s34, %s35
      %p46 = scmp.eq.s32.totalorder %s26, 0
      %p47 = por %p45, %p46
      %p48 = scmp.ne.s32.totalorder %s34, %s35
      %p49 = scmp.eq.s32.totalorder %s27, 1
      %p50 = por %p48, %p49
      %p52 = scmp.ne.s32.totalorder %s35, %s51
      %p53 = scmp.eq.s32.totalorder %s27, 0
      %p54 = por %p52, %p53
      %s56 = sadd.s32 %s55, 1
      %p59 = scmp.eq.s32.totalorder %s21, 1
      %p60 = scmp.ne.s32.totalorder %s55, %s57
      %p61 = scmp.eq.s32.totalorder %s21, 0
      %p62 = por %p60, %p61
      %p63 = scmp.ne.s32.totalorder %s55, %s57
      %p64 = scmp.eq.s32.totalorder %s26, 1
      %p65 = por %p63, %p64
      %p66 = scmp.ne.s32.totalorder %s57, %s58
      %p67 = scmp.eq.s32.totalorder %s26, 0
      %p68 = por %p66, %p67
      %p69 = scmp.ne.s32.totalorder %s57, %s58
      %p70 = scmp.eq.s32.totalorder %s27, 1
      %p71 = por %p69, %p70
      %p73 = scmp.ne.s32.totalorder %s58, %s72
      %p74 = scmp.eq.s32.totalorder %s27, 0
      %p75 = por %p73, %p74
      %s77 = sadd.s32 %s76, 1
      %p80 = scmp.eq.s32.totalorder %s21, 1
      %p81 = scmp.ne.s32.totalorder %s76, %s78
      %p82 = scmp.eq.s32.totalorder %s21, 0
      %p83 = por %p81, %p82
      %p84 = scmp.ne.s32.totalorder %s76, %s78
      %p85 = scmp.eq.s32.totalorder %s26, 1
      %p86 = por %p84, %p85
      %p87 = scmp.ne.s32.totalorder %s78, %s79
      %p88 = scmp.eq.s32.totalorder %s26, 0
      %p89 = por %p87, %p88
      %p90 = scmp.ne.s32.totalorder %s78, %s79
      %p91 = scmp.eq.s32.totalorder %s27, 1
      %p92 = por %p90, %p91
      %p94 = scmp.ne.s32.totalorder %s79, %s93
      %p95 = scmp.eq.s32.totalorder %s27, 0
      %p96 = por %p94, %p95
      %s98 = sadd.s32 %s97, 1
      %p101 = scmp.eq.s32.totalorder %s21, 1
      %p102 = scmp.ne.s32.totalorder %s97, %s99
      %p103 = scmp.eq.s32.totalorder %s21, 0
      %p104 = por %p102, %p103
      %p105 = scmp.ne.s32.totalorder %s97, %s99
      %p106 = scmp.eq.s32.totalorder %s26, 1
      %p107 = por %p105, %p106
      %p108 = scmp.ne.s32.totalorder %s99, %s100
      %p109 = scmp.eq.s32.totalorder %s26, 0
      %p110 = por %p108, %p109
      %p111 = scmp.ne.s32.totalorder %s99, %s100
      %p112 = scmp.eq.s32.totalorder %s27, 1
      %p113 = por %p111, %p112
      %p115 = scmp.ne.s32.totalorder %s100, %s114
      %p116 = scmp.eq.s32.totalorder %s27, 0
      %p117 = por %p115, %p116
      %s119 = sadd.s32 %s118, 1
      %p122 = scmp.eq.s32.totalorder %s21, 1
      %p123 = scmp.ne.s32.totalorder %s118, %s120
      %p124 = scmp.eq.s32.totalorder %s21, 0
      %p125 = por %p123, %p124
      %p126 = scmp.ne.s32.totalorder %s118, %s120
      %p127 = scmp.eq.s32.totalorder %s26, 1
      %p128 = por %p126, %p127
      %p129 = scmp.ne.s32.totalorder %s120, %s121
      %p130 = scmp.eq.s32.totalorder %s26, 0
      %p131 = por %p129, %p130
      %p132 = scmp.ne.s32.totalorder %s120, %s121
      %p133 = scmp.eq.s32.totalorder %s27, 1
      %p134 = por %p132, %p133
      %p136 = scmp.ne.s32.totalorder %s121, %s135
      %p137 = scmp.eq.s32.totalorder %s27, 0
      %p138 = por %p136, %p137
      %s140 = sadd.s32 %s139, 1
      %p143 = scmp.eq.s32.totalorder %s21, 1
      %p144 = scmp.ne.s32.totalorder %s139, %s141
      %p145 = scmp.eq.s32.totalorder %s21, 0
      %p146 = por %p144, %p145
      %p147 = scmp.ne.s32.totalorder %s139, %s141
      %p148 = scmp.eq.s32.totalorder %s26, 1
      %p149 = por %p147, %p148
      %p150 = scmp.ne.s32.totalorder %s141, %s142
      %p151 = scmp.eq.s32.totalorder %s26, 0
      %p152 = por %p150, %p151
      %p153 = scmp.ne.s32.totalorder %s141, %s142
      %p154 = scmp.eq.s32.totalorder %s27, 1
      %p155 = por %p153, %p154
      %p157 = scmp.ne.s32.totalorder %s142, %s156
      %p158 = scmp.eq.s32.totalorder %s27, 0
      %p159 = por %p157, %p158
      %s161 = sadd.s32 %s160, 1
      %p164 = scmp.eq.s32.totalorder %s21, 1
      %p165 = scmp.ne.s32.totalorder %s160, %s162
      %p166 = scmp.eq.s32.totalorder %s21, 0
      %p167 = por %p165, %p166
      %p168 = scmp.ne.s32.totalorder %s160, %s162
      %p169 = scmp.eq.s32.totalorder %s26, 1
      %p170 = por %p168, %p169
      %p171 = scmp.ne.s32.totalorder %s162, %s163
      %p172 = scmp.eq.s32.totalorder %s26, 0
      %p173 = por %p171, %p172
      %p174 = scmp.ne.s32.totalorder %s162, %s163
      %p175 = scmp.eq.s32.totalorder %s27, 1
      %p176 = por %p174, %p175
      %p178 = scmp.ne.s32.totalorder %s163, %s177
      %p179 = scmp.eq.s32.totalorder %s27, 0
      %p180 = por %p178, %p179
      %s182 = sadd.s32 %s181, 1
      %p185 = scmp.eq.s32.totalorder %s21, 1
      %p186 = scmp.ne.s32.totalorder %s181, %s183
      %p187 = scmp.eq.s32.totalorder %s21, 0
      %p188 = por %p186, %p187
      %p189 = scmp.ne.s32.totalorder %s181, %s183
      %p190 = scmp.eq.s32.totalorder %s26, 1
      %p191 = por %p189, %p190
      %p192 = scmp.ne.s32.totalorder %s183, %s184
      %p193 = scmp.eq.s32.totalorder %s26, 0
      %p194 = por %p192, %p193
      %p195 = scmp.ne.s32.totalorder %s183, %s184
      %p196 = scmp.eq.s32.totalorder %s27, 1
      %p197 = por %p195, %p196
      %p199 = scmp.ne.s32.totalorder %s184, %s198
      %p200 = scmp.eq.s32.totalorder %s27, 0
      %p201 = por %p199, %p200
      %s203 = sadd.s32 %s202, 1
      %p206 = scmp.eq.s32.totalorder %s21, 1
      %p207 = scmp.ne.s32.totalorder %s202, %s204
      %p208 = scmp.eq.s32.totalorder %s21, 0
      %p209 = por %p207, %p208
      %p210 = scmp.ne.s32.totalorder %s202, %s204
      %p211 = scmp.eq.s32.totalorder %s26, 1
      %p212 = por %p210, %p211
      %p213 = scmp.ne.s32.totalorder %s204, %s205
      %p214 = scmp.eq.s32.totalorder %s26, 0
      %p215 = por %p213, %p214
      %p216 = scmp.ne.s32.totalorder %s204, %s205
      %p217 = scmp.eq.s32.totalorder %s27, 1
      %p218 = por %p216, %p217
      %p220 = scmp.ne.s32.totalorder %s205, %s219
      %p221 = scmp.eq.s32.totalorder %s27, 0
      %p222 = por %p220, %p221
      %s224 = sadd.s32 %s223, 1
      %p227 = scmp.eq.s32.totalorder %s21, 1
      %p228 = scmp.ne.s32.totalorder %s223, %s225
      %p229 = scmp.eq.s32.totalorder %s21, 0
      %p230 = por %p228, %p229
      %p231 = scmp.ne.s32.totalorder %s223, %s225
      %p232 = scmp.eq.s32.totalorder %s26, 1
      %p233 = por %p231, %p232
      %p234 = scmp.ne.s32.totalorder %s225, %s226
      %p235 = scmp.eq.s32.totalorder %s26, 0
      %p236 = por %p234, %p235
      %p237 = scmp.ne.s32.totalorder %s225, %s226
      %p238 = scmp.eq.s32.totalorder %s27, 1
      %p239 = por %p237, %p238
      %p241 = scmp.ne.s32.totalorder %s226, %s240
      %p242 = scmp.eq.s32.totalorder %s27, 0
      %p243 = por %p241, %p242
      %s245 = sadd.s32 %s244, 1
      %p248 = scmp.eq.s32.totalorder %s21, 1
      %p249 = scmp.ne.s32.totalorder %s244, %s246
      %p250 = scmp.eq.s32.totalorder %s21, 0
      %p251 = por %p249, %p250
      %p252 = scmp.ne.s32.totalorder %s244, %s246
      %p253 = scmp.eq.s32.totalorder %s26, 1
      %p254 = por %p252, %p253
      %p255 = scmp.ne.s32.totalorder %s246, %s247
      %p256 = scmp.eq.s32.totalorder %s26, 0
      %p257 = por %p255, %p256
      %p258 = scmp.ne.s32.totalorder %s246, %s247
      %p259 = scmp.eq.s32.totalorder %s27, 1
      %p260 = por %p258, %p259
      %p262 = scmp.ne.s32.totalorder %s247, %s261
      %p263 = scmp.eq.s32.totalorder %s27, 0
      %p264 = por %p262, %p263
      %s266 = sadd.s32 %s265, 1
      %p269 = scmp.eq.s32.totalorder %s21, 1
      %p270 = scmp.ne.s32.totalorder %s265, %s267
      %p271 = scmp.eq.s32.totalorder %s21, 0
      %p272 = por %p270, %p271
      %p273 = scmp.ne.s32.totalorder %s265, %s267
      %p274 = scmp.eq.s32.totalorder %s26, 1
      %p275 = por %p273, %p274
      %p276 = scmp.ne.s32.totalorder %s267, %s268
      %p277 = scmp.eq.s32.totalorder %s26, 0
      %p278 = por %p276, %p277
      %p279 = scmp.ne.s32.totalorder %s267, %s268
      %p280 = scmp.eq.s32.totalorder %s27, 1
      %p281 = por %p279, %p280
      %p283 = scmp.ne.s32.totalorder %s268, %s282
      %p284 = scmp.eq.s32.totalorder %s27, 0
      %p285 = por %p283, %p284
      %s286 = ssub.s32 %s21, %s28
      %p287 = scmp.eq.s32.totalorder %s286, 0
      %s289 = sadd.s32 %s288, 1
      %s290 = scalar_select %p287, %s288, %s289
      %p293 = pneg %p287
      %p294 = scmp.eq.s32.totalorder %s21, 1
      %p295 = por %p293, %p294
      %p296 = scmp.ne.s32.totalorder %s288, %s291
      %p297 = scmp.eq.s32.totalorder %s21, 0
      %p298 = por %p296, %p297
      %p299 = scmp.ne.s32.totalorder %s288, %s291
      %p300 = scmp.eq.s32.totalorder %s26, 1
      %p301 = por %p299, %p300
      %p302 = scmp.ne.s32.totalorder %s291, %s292
      %p303 = scmp.eq.s32.totalorder %s26, 0
      %p304 = por %p302, %p303
      %p305 = scmp.ne.s32.totalorder %s291, %s292
      %p306 = scmp.eq.s32.totalorder %s27, 1
      %p307 = por %p305, %p306
      %p309 = scmp.ne.s32.totalorder %s292, %s308
      %p310 = scmp.eq.s32.totalorder %s27, 0
      %p311 = por %p309, %p310
      %p312 = scmp.le.s32.totalorder 1, %s21
      %p313 = scmp.lt.s32.totalorder %s21, 3
      %p314 = pnand %p312, %p313
      %p315 = pneg %p314
      // Predicated region
      $region9: #{tpu_custom_call.1} parent=5 // pred_check
        _
      $region10: #{tpu_custom_call.1} parent=5 // pred_check_branch
        %317 = sbr.rel (%p314) target = $region12
      $region11: #{tpu_custom_call.1} parent=5 // pred_region
        %s318 = ssub.s32 %s21, 1
        // Predicated region
        $region13: #{tpu_custom_call.1} parent=11 // pred_check
          %p319 = pneg %p68
        $region14: #{tpu_custom_call.1} parent=11 // pred_check_branch
          %321 = sbr.rel (%p319) target = $region16
        $region15: #{tpu_custom_call.1} parent=11 // pred_region
          _
        $region16: #{tpu_custom_call.1} parent=11 // pred_fallthru
          _
        // Predicated region
        $region17: #{tpu_custom_call.1} parent=11 // pred_check
          %p322 = pneg %p89
        $region18: #{tpu_custom_call.1} parent=11 // pred_check_branch
          %324 = sbr.rel (%p322) target = $region20
        $region19: #{tpu_custom_call.1} parent=11 // pred_region
          _
        $region20: #{tpu_custom_call.1} parent=11 // pred_fallthru
          _
        // Predicated region
        $region21: #{tpu_custom_call.1} parent=11 // pred_check
          %p325 = pneg %p110
        $region22: #{tpu_custom_call.1} parent=11 // pred_check_branch
          %327 = sbr.rel (%p325) target = $region24
        $region23: #{tpu_custom_call.1} parent=11 // pred_region
          _
        $region24: #{tpu_custom_call.1} parent=11 // pred_fallthru
          _
        // Predicated region
        $region25: #{tpu_custom_call.1} parent=11 // pred_check
          %p328 = pneg %p131
        $region26: #{tpu_custom_call.1} parent=11 // pred_check_branch
          %330 = sbr.rel (%p328) target = $region28
        $region27: #{tpu_custom_call.1} parent=11 // pred_region
          _
        $region28: #{tpu_custom_call.1} parent=11 // pred_fallthru
          _
        // Predicated region
        $region29: #{tpu_custom_call.1} parent=11 // pred_check
          %p331 = pneg %p152
        $region30: #{tpu_custom_call.1} parent=11 // pred_check_branch
          %333 = sbr.rel (%p331) target = $region32
        $region31: #{tpu_custom_call.1} parent=11 // pred_region
          _
        $region32: #{tpu_custom_call.1} parent=11 // pred_fallthru
          _
        // Predicated region
        $region33: #{tpu_custom_call.1} parent=11 // pred_check
          %p334 = pneg %p173
        $region34: #{tpu_custom_call.1} parent=11 // pred_check_branch
          %336 = sbr.rel (%p334) target = $region36
        $region35: #{tpu_custom_call.1} parent=11 // pred_region
          _
        $region36: #{tpu_custom_call.1} parent=11 // pred_fallthru
          _
        // Predicated region
        $region37: #{tpu_custom_call.1} parent=11 // pred_check
          %p337 = pneg %p194
        $region38: #{tpu_custom_call.1} parent=11 // pred_check_branch
          %339 = sbr.rel (%p337) target = $region40
        $region39: #{tpu_custom_call.1} parent=11 // pred_region
          _
        $region40: #{tpu_custom_call.1} parent=11 // pred_fallthru
          _
        // Predicated region
        $region41: #{tpu_custom_call.1} parent=11 // pred_check
          %p340 = pneg %p215
        $region42: #{tpu_custom_call.1} parent=11 // pred_check_branch
          %342 = sbr.rel (%p340) target = $region44
        $region43: #{tpu_custom_call.1} parent=11 // pred_region
          _
        $region44: #{tpu_custom_call.1} parent=11 // pred_fallthru
          _
        // Predicated region
        $region45: #{tpu_custom_call.1} parent=11 // pred_check
          %p343 = pneg %p236
        $region46: #{tpu_custom_call.1} parent=11 // pred_check_branch
          %345 = sbr.rel (%p343) target = $region48
        $region47: #{tpu_custom_call.1} parent=11 // pred_region
          _
        $region48: #{tpu_custom_call.1} parent=11 // pred_fallthru
          _
        // Predicated region
        $region49: #{tpu_custom_call.1} parent=11 // pred_check
          %p346 = pneg %p257
        $region50: #{tpu_custom_call.1} parent=11 // pred_check_branch
          %348 = sbr.rel (%p346) target = $region52
        $region51: #{tpu_custom_call.1} parent=11 // pred_region
          _
        $region52: #{tpu_custom_call.1} parent=11 // pred_fallthru
          _
        // Predicated region
        $region53: #{tpu_custom_call.1} parent=11 // pred_check
          %p349 = pneg %p278
        $region54: #{tpu_custom_call.1} parent=11 // pred_check_branch
          %351 = sbr.rel (%p349) target = $region56
        $region55: #{tpu_custom_call.1} parent=11 // pred_region
          _
        $region56: #{tpu_custom_call.1} parent=11 // pred_fallthru
          _
      $region12: #{tpu_custom_call.1} parent=5 // pred_fallthru
        _
      %p352 = scmp.lt.s32.totalorder %s21, 2
      // Predicated region
      $region57: #{tpu_custom_call.1} parent=5 // pred_check
        %p353 = pneg %p352
      $region58: #{tpu_custom_call.1} parent=5 // pred_check_branch
        %355 = sbr.rel (%p353) target = $region60
      $region59: #{tpu_custom_call.1} parent=5 // pred_region
        // Predicated region
        $region61: #{tpu_custom_call.1} parent=59 // pred_check
          %p356 = pneg %p41
        $region62: #{tpu_custom_call.1} parent=59 // pred_check_branch
          %358 = sbr.rel (%p356) target = $region64
        $region63: #{tpu_custom_call.1} parent=59 // pred_region
          %p359 = scmp.lt.s32.totalorder %s21, 1
          %s360 = scalar_select %p359, %s21, 1
          %s361 = smul.addr %s360, 8
          %s362 = scalar_lea.vmem %s0, %s361
        $region64: #{tpu_custom_call.1} parent=59 // pred_fallthru
          _
      $region60: #{tpu_custom_call.1} parent=5 // pred_fallthru
        _
      %p363 = scmp.le.s32.totalorder 1, %s21
      %p364 = scmp.lt.s32.totalorder %s21, 3
      %p365 = pnand %p363, %p364
      %p366 = pneg %p365
      // Predicated region
      $region65: #{tpu_custom_call.1} parent=5 // pred_check
        _
      $region66: #{tpu_custom_call.1} parent=5 // pred_check_branch
        %368 = sbr.rel (%p365) target = $region68
      $region67: #{tpu_custom_call.1} parent=5 // pred_region
        %s369 = ssub.s32 %s21, 1
        %p370 = scmp.lt.s32.totalorder %s26, 1
        %s371 = scalar_select %p370, %s26, 1
        %s372 = smul.addr %s371, 8
        %s373 = scalar_lea.vmem %s0, %s372
        %p374 = pneg %p47
        %p375 = pneg %p44
        %p376 = pneg %p68
        %p377 = pneg %p65
        %p378 = pneg %p89
        %p379 = pneg %p86
        %p380 = pneg %p110
        %p381 = pneg %p107
        %p382 = pneg %p131
        %p383 = pneg %p128
        %p384 = pneg %p152
        %p385 = pneg %p149
        %p386 = pneg %p173
        %p387 = pneg %p170
        %p388 = pneg %p194
        %p389 = pneg %p191
        %p390 = pneg %p215
        %p391 = pneg %p212
        %p392 = pneg %p236
        %p393 = pneg %p233
        %p394 = pneg %p257
        %p395 = pneg %p254
        %p396 = pneg %p278
        %p397 = pneg %p275
        %p398 = pneg %p304
        %p399 = pneg %p301
        %s400 = sand.u32 %s291, 1
        %s401 = scalar_lea.sflag [#allocation3], %s400
        %s402 = sand.u32 %s291, 1
        %s403 = smul.addr %s402, 8
        %s404 = scalar_lea.vmem [#allocation2], %s403
        %p405 = scmp.lt.s32.totalorder %s26, 1
        %s406 = scalar_select %p405, %s26, 1
        %s407 = smul.addr %s406, 8
        %s408 = scalar_lea.vmem %s0, %s407
        %v409 = vld [vmem:[%s408] sm:$0xff]
        %v410 = vld [vmem:[%s1] sm:$0x1]
        %v411 = vld [vmem:[%s2] sm:$0x1]
        %vm412 = vcmask 523264
        %v413 = vsel %vm412, %v409, 0.0
        %414 = vadd.xlane.f32.xlu0 %v413
        %v415 = vpop.xlane.xlu0 %414
        %v416 = vrcp.pop 64.0
        %v417 = vmul.f32 %v415, %v416
        %v418 = vsub.f32 %v409, %v417
        %v419 = vmul.f32 %v418, %v418
        %v420 = vsel %vm412, %v419, 0.0
        %421 = vadd.xlane.f32.xlu0 %v420
        %v422 = vpop.xlane.xlu0 %421
        %v423 = vmul.f32 %v422, %v416
        %v424 = vadd.f32 %v423, 1e-05
        %v425 = vrsqrt.pop %v424
        %v426 = vmul.f32 %v418, %v425
        %v428 = vlaneseq
        %v429 = vshrl.u32 %v428, 7
        %v430 = vsub.s32 0, %v429
        %v431 = vrot.slane %v410, %v430
        %v433 = vmul.f32 %v426, %v431
        %v435 = vlaneseq
        %v436 = vshrl.u32 %v435, 7
        %v437 = vsub.s32 0, %v436
        %v438 = vrot.slane %v411, %v437
        %v440 = vadd.f32 %v433, %v438
        %v441 = vld [vmem:[%s3] sm:$0xff]
        %v442 = vld [vmem:[%s3 + $0x8] sm:$0xff]
        %v443 = vld [vmem:[%s3 + $0x10] sm:$0xff]
        %v444 = vld [vmem:[%s3 + $0x18] sm:$0xff]
        %v445 = vld [vmem:[%s3 + $0x20] sm:$0xff]
        %v446 = vld [vmem:[%s3 + $0x28] sm:$0xff]
        %v447 = vld [vmem:[%s3 + $0x30] sm:$0xff]
        %v448 = vld [vmem:[%s3 + $0x38] sm:$0xff]
        %v449 = vld [vmem:[%s3 + $0x40] sm:$0xff]
        %v450 = vld [vmem:[%s3 + $0x48] sm:$0xff]
        %v451 = vld [vmem:[%s3 + $0x50] sm:$0xff]
        %v452 = vld [vmem:[%s3 + $0x58] sm:$0xff]
        %v453 = vld [vmem:[%s3 + $0x60] sm:$0xff]
        %v454 = vld [vmem:[%s3 + $0x68] sm:$0xff]
        %v455 = vld [vmem:[%s3 + $0x70] sm:$0xff]
        %v456 = vld [vmem:[%s3 + $0x78] sm:$0xff]
        %v458 = vsel %vm412, %v440, 0
        %460 = vmatprep.subr.mxu0 0.0
        %461 = vmatpush1.msra.mxu0 0.0
        %462 = vmatprep.subr.mxu0 0.0
        %463 = vmatpush1.msra.mxu0 0.0
        %464 = vmatprep.subr.mxu0 0.0
        %465 = vmatpush1.msra.mxu0 0.0
        %466 = vmatprep.subr.mxu0 0.0
        %467 = vmatpush1.msra.mxu0 0.0
        %468 = vmatprep.subr.mxu0 0.0
        %469 = vmatpush1.msra.mxu0 0.0
        %470 = vmatprep.subr.mxu0 0.0
        %471 = vmatpush1.msra.mxu0 0.0
        %472 = vmatprep.subr.mxu0 0.0
        %473 = vmatpush1.msra.mxu0 0.0
        %474 = vmatprep.subr.mxu0 0.0
        %475 = vmatpush1.msra.mxu0 0.0
        %476 = vmatprep.subr.mxu0 %v456
        %477 = vmatpush1.msra.mxu0 %v455
        %478 = vmatprep.subr.mxu0 %v454
        %479 = vmatpush1.msra.mxu0 %v453
        %480 = vmatprep.subr.mxu0 %v452
        %481 = vmatpush1.msra.mxu0 %v451
        %482 = vmatprep.subr.mxu0 %v450
        %483 = vmatpush1.msra.mxu0 %v449
        %484 = vmatprep.subr.mxu0 %v448
        %485 = vmatpush1.msra.mxu0 %v447
        %486 = vmatprep.subr.mxu0 %v446
        %487 = vmatpush1.msra.mxu0 %v445
        %488 = vmatprep.subr.mxu0 %v444
        %489 = vmatpush1.msra.mxu0 %v443
        %490 = vmatprep.subr.mxu0 %v442
        %491 = vmatpush1.msra.mxu0 %v441
        %492 = vmatprep.subr.mxu0 0.0
        %493 = vmatpush2.msra.mxu0 0.0
        %494 = vmatprep.subr.mxu0 0.0
        %495 = vmatpush2.msra.mxu0 0.0
        %496 = vmatprep.subr.mxu0 0.0
        %497 = vmatpush2.msra.mxu0 0.0
        %498 = vmatprep.subr.mxu0 0.0
        %499 = vmatpush2.msra.mxu0 0.0
        %500 = vmatprep.subr.mxu0 0.0
        %501 = vmatpush2.msra.mxu0 0.0
        %502 = vmatprep.subr.mxu0 0.0
        %503 = vmatpush2.msra.mxu0 0.0
        %504 = vmatprep.subr.mxu0 0.0
        %505 = vmatpush2.msra.mxu0 0.0
        %506 = vmatprep.subr.mxu0 0.0
        %507 = vmatpush2.msra.mxu0 0.0
        %508 = vmatprep.subr.mxu0 0.0
        %509 = vmatpush2.msra.mxu0 0.0
        %510 = vmatprep.subr.mxu0 0.0
        %511 = vmatpush2.msra.mxu0 0.0
        %512 = vmatprep.subr.mxu0 0.0
        %513 = vmatpush2.msra.mxu0 0.0
        %514 = vmatprep.subr.mxu0 0.0
        %515 = vmatpush2.msra.mxu0 0.0
        %516 = vmatprep.subr.mxu0 0.0
        %517 = vmatpush2.msra.mxu0 0.0
        %518 = vmatprep.subr.mxu0 0.0
        %519 = vmatpush2.msra.mxu0 0.0
        %520 = vmatprep.subr.mxu0 0.0
        %521 = vmatpush2.msra.mxu0 0.0
        %522 = vmatprep.subr.mxu0 0.0
        %523 = vmatpush2.msra.mxu0 0.0
        %524 = vmatprep.mubr.f32.mxu0 0.0
        %525 = vmatmul.mubr.f32.gmra.mxu0 %v458
        %v526 = vpop.f32.mrf.mxu0
        %v527 = vadd.f32 0.0, %v526
        %v528 = vpop.f32.mrf.mxu0
        %v529 = vadd.f32 0.0, %v528
        %530 = vdwg.mxu0
        %v531 = vlaneseq
        %v532 = vshrl.u32 %v531, 7
        %v533 = vlaneseq
        %v534 = vand.u32 %v533, 127
        %vm535 = vcmp.le.s32.totalorder %v534, %v532
        %537 = vrot.lane.b32.xlu0 %v527, 64
        %v538 = vpop.permute.xlu0 %537
        %vm539 = vcmask 130048
        %v540 = vsel %vm539, %v527, 0
        %v542 = vsel %vm539, %v538, 0
        %544 = vmatprep.subr.mxu0 0.0
        %545 = vmatpush1.xpose.msra.mxu0 0.0
        %546 = vmatprep.subr.mxu0 0.0
        %547 = vmatpush1.xpose.msra.mxu0 0.0
        %548 = vmatprep.subr.mxu0 0.0
        %549 = vmatpush1.xpose.msra.mxu0 0.0
        %550 = vmatprep.subr.mxu0 0.0
        %551 = vmatpush1.xpose.msra.mxu0 0.0
        %552 = vmatprep.subr.mxu0 0.0
        %553 = vmatpush1.xpose.msra.mxu0 0.0
        %554 = vmatprep.subr.mxu0 0.0
        %555 = vmatpush1.xpose.msra.mxu0 0.0
        %556 = vmatprep.subr.mxu0 0.0
        %557 = vmatpush1.xpose.msra.mxu0 0.0
        %558 = vmatprep.subr.mxu0 0.0
        %559 = vmatpush1.xpose.msra.mxu0 0.0
        %560 = vmatprep.subr.mxu0 0.0
        %561 = vmatpush1.xpose.msra.mxu0 0.0
        %562 = vmatprep.subr.mxu0 0.0
        %563 = vmatpush1.xpose.msra.mxu0 0.0
        %564 = vmatprep.subr.mxu0 0.0
        %565 = vmatpush1.xpose.msra.mxu0 0.0
        %566 = vmatprep.subr.mxu0 0.0
        %567 = vmatpush1.xpose.msra.mxu0 0.0
        %568 = vmatprep.subr.mxu0 0.0
        %569 = vmatpush1.xpose.msra.mxu0 0.0
        %570 = vmatprep.subr.mxu0 0.0
        %571 = vmatpush1.xpose.msra.mxu0 0.0
        %572 = vmatprep.subr.mxu0 0.0
        %573 = vmatpush1.xpose.msra.mxu0 0.0
        %574 = vmatprep.subr.mxu0 0.0
        %575 = vmatpush1.xpose.msra.mxu0 %v542
        %576 = vmatprep.subr.mxu0 0.0
        %577 = vmatpush2.xpose.msra.mxu0 0.0
        %578 = vmatprep.subr.mxu0 0.0
        %579 = vmatpush2.xpose.msra.mxu0 0.0
        %580 = vmatprep.subr.mxu0 0.0
        %581 = vmatpush2.xpose.msra.mxu0 0.0
        %582 = vmatprep.subr.mxu0 0.0
        %583 = vmatpush2.xpose.msra.mxu0 0.0
        %584 = vmatprep.subr.mxu0 0.0
        %585 = vmatpush2.xpose.msra.mxu0 0.0
        %586 = vmatprep.subr.mxu0 0.0
        %587 = vmatpush2.xpose.msra.mxu0 0.0
        %588 = vmatprep.subr.mxu0 0.0
        %589 = vmatpush2.xpose.msra.mxu0 0.0
        %590 = vmatprep.subr.mxu0 0.0
        %591 = vmatpush2.xpose.msra.mxu0 0.0
        %592 = vmatprep.subr.mxu0 0.0
        %593 = vmatpush2.xpose.msra.mxu0 0.0
        %594 = vmatprep.subr.mxu0 0.0
        %595 = vmatpush2.xpose.msra.mxu0 0.0
        %596 = vmatprep.subr.mxu0 0.0
        %597 = vmatpush2.xpose.msra.mxu0 0.0
        %598 = vmatprep.subr.mxu0 0.0
        %599 = vmatpush2.xpose.msra.mxu0 0.0
        %600 = vmatprep.subr.mxu0 0.0
        %601 = vmatpush2.xpose.msra.mxu0 0.0
        %602 = vmatprep.subr.mxu0 0.0
        %603 = vmatpush2.xpose.msra.mxu0 0.0
        %604 = vmatprep.subr.mxu0 0.0
        %605 = vmatpush2.xpose.msra.mxu0 0.0
        %606 = vmatprep.subr.mxu0 0.0
        %607 = vmatpush2.xpose.msra.mxu0 0.0
        %608 = vmatprep.mubr.f32.mxu0 0.0
        %609 = vmatmul.mubr.f32.gmra.mxu0 %v540
        %v610 = vpop.f32.mrf.mxu0
        %v611 = vadd.f32 0.0, %v610
        %v612 = vpop.f32.mrf.mxu0
        %613 = vdwg.mxu0
        %v614 = vsel %vm535, %v611, -inf
        %vm615 = vcmask 64512
        %v616 = vsel %vm615, %v614, -inf
        %617 = vmax.xlane.f32.xlu0 %v616
        %v618 = vpop.xlane.xlu0 %617
        %v619 = vsub.f32 %v614, %v618
        %v620 = vmul.f32 %v619, 1.442695
        %v621 = vpow.pop %v620
        %v622 = vsel %vm615, %v621, 0.0
        %623 = vadd.xlane.f32.xlu0 %v622
        %v624 = vpop.xlane.xlu0 %623
        %v625 = vrcp.pop %v624
        %v626 = vmul.f32 %v621, %v625
        %v628 = vsel %vm615, %v626, 0
        %630 = vmatprep.subr.mxu0 0.0
        %631 = vmatpush1.msra.mxu0 0.0
        %632 = vmatprep.subr.mxu0 0.0
        %633 = vmatpush1.msra.mxu0 0.0
        %634 = vmatprep.subr.mxu0 0.0
        %635 = vmatpush1.msra.mxu0 0.0
        %636 = vmatprep.subr.mxu0 0.0
        %637 = vmatpush1.msra.mxu0 0.0
        %638 = vmatprep.subr.mxu0 0.0
        %639 = vmatpush1.msra.mxu0 0.0
        %640 = vmatprep.subr.mxu0 0.0
        %641 = vmatpush1.msra.mxu0 0.0
        %642 = vmatprep.subr.mxu0 0.0
        %643 = vmatpush1.msra.mxu0 0.0
        %644 = vmatprep.subr.mxu0 0.0
        %645 = vmatpush1.msra.mxu0 0.0
        %646 = vmatprep.subr.mxu0 0.0
        %647 = vmatpush1.msra.mxu0 0.0
        %648 = vmatprep.subr.mxu0 0.0
        %649 = vmatpush1.msra.mxu0 0.0
        %650 = vmatprep.subr.mxu0 0.0
        %651 = vmatpush1.msra.mxu0 0.0
        %652 = vmatprep.subr.mxu0 0.0
        %653 = vmatpush1.msra.mxu0 0.0
        %654 = vmatprep.subr.mxu0 0.0
        %655 = vmatpush1.msra.mxu0 0.0
        %656 = vmatprep.subr.mxu0 0.0
        %657 = vmatpush1.msra.mxu0 0.0
        %658 = vmatprep.subr.mxu0 0.0
        %659 = vmatpush1.msra.mxu0 0.0
        %660 = vmatprep.subr.mxu0 0.0
        %661 = vmatpush1.msra.mxu0 %v529
        %662 = vmatprep.subr.mxu0 0.0
        %663 = vmatpush2.msra.mxu0 0.0
        %664 = vmatprep.subr.mxu0 0.0
        %665 = vmatpush2.msra.mxu0 0.0
        %666 = vmatprep.subr.mxu0 0.0
        %667 = vmatpush2.msra.mxu0 0.0
        %668 = vmatprep.subr.mxu0 0.0
        %669 = vmatpush2.msra.mxu0 0.0
        %670 = vmatprep.subr.mxu0 0.0
        %671 = vmatpush2.msra.mxu0 0.0
        %672 = vmatprep.subr.mxu0 0.0
        %673 = vmatpush2.msra.mxu0 0.0
        %674 = vmatprep.subr.mxu0 0.0
        %675 = vmatpush2.msra.mxu0 0.0
        %676 = vmatprep.subr.mxu0 0.0
        %677 = vmatpush2.msra.mxu0 0.0
        %678 = vmatprep.subr.mxu0 0.0
        %679 = vmatpush2.msra.mxu0 0.0
        %680 = vmatprep.subr.mxu0 0.0
        %681 = vmatpush2.msra.mxu0 0.0
        %682 = vmatprep.subr.mxu0 0.0
        %683 = vmatpush2.msra.mxu0 0.0
        %684 = vmatprep.subr.mxu0 0.0
        %685 = vmatpush2.msra.mxu0 0.0
        %686 = vmatprep.subr.mxu0 0.0
        %687 = vmatpush2.msra.mxu0 0.0
        %688 = vmatprep.subr.mxu0 0.0
        %689 = vmatpush2.msra.mxu0 0.0
        %690 = vmatprep.subr.mxu0 0.0
        %691 = vmatpush2.msra.mxu0 0.0
        %692 = vmatprep.subr.mxu0 0.0
        %693 = vmatpush2.msra.mxu0 0.0
        %694 = vmatprep.mubr.f32.mxu0 0.0
        %695 = vmatmul.mubr.f32.gmra.mxu0 %v628
        %v696 = vpop.f32.mrf.mxu0
        %v697 = vadd.f32 0.0, %v696
        %v698 = vpop.f32.mrf.mxu0
        %699 = vdwg.mxu0
        %700 = vrot.lane.b32.xlu0 %v527, 112
        %v701 = vpop.permute.xlu0 %700
        %702 = vrot.lane.b32.xlu0 %v527, 48
        %v703 = vpop.permute.xlu0 %702
        %v704 = vsel %vm539, %v701, 0
        %v706 = vsel %vm539, %v703, 0
        %708 = vmatprep.subr.mxu0 0.0
        %709 = vmatpush1.xpose.msra.mxu0 0.0
        %710 = vmatprep.subr.mxu0 0.0
        %711 = vmatpush1.xpose.msra.mxu0 0.0
        %712 = vmatprep.subr.mxu0 0.0
        %713 = vmatpush1.xpose.msra.mxu0 0.0
        %714 = vmatprep.subr.mxu0 0.0
        %715 = vmatpush1.xpose.msra.mxu0 0.0
        %716 = vmatprep.subr.mxu0 0.0
        %717 = vmatpush1.xpose.msra.mxu0 0.0
        %718 = vmatprep.subr.mxu0 0.0
        %719 = vmatpush1.xpose.msra.mxu0 0.0
        %720 = vmatprep.subr.mxu0 0.0
        %721 = vmatpush1.xpose.msra.mxu0 0.0
        %722 = vmatprep.subr.mxu0 0.0
        %723 = vmatpush1.xpose.msra.mxu0 0.0
        %724 = vmatprep.subr.mxu0 0.0
        %725 = vmatpush1.xpose.msra.mxu0 0.0
        %726 = vmatprep.subr.mxu0 0.0
        %727 = vmatpush1.xpose.msra.mxu0 0.0
        %728 = vmatprep.subr.mxu0 0.0
        %729 = vmatpush1.xpose.msra.mxu0 0.0
        %730 = vmatprep.subr.mxu0 0.0
        %731 = vmatpush1.xpose.msra.mxu0 0.0
        %732 = vmatprep.subr.mxu0 0.0
        %733 = vmatpush1.xpose.msra.mxu0 0.0
        %734 = vmatprep.subr.mxu0 0.0
        %735 = vmatpush1.xpose.msra.mxu0 0.0
        %736 = vmatprep.subr.mxu0 0.0
        %737 = vmatpush1.xpose.msra.mxu0 0.0
        %738 = vmatprep.subr.mxu0 0.0
        %739 = vmatpush1.xpose.msra.mxu0 %v706
        %740 = vmatprep.subr.mxu0 0.0
        %741 = vmatpush2.xpose.msra.mxu0 0.0
        %742 = vmatprep.subr.mxu0 0.0
        %743 = vmatpush2.xpose.msra.mxu0 0.0
        %744 = vmatprep.subr.mxu0 0.0
        %745 = vmatpush2.xpose.msra.mxu0 0.0
        %746 = vmatprep.subr.mxu0 0.0
        %747 = vmatpush2.xpose.msra.mxu0 0.0
        %748 = vmatprep.subr.mxu0 0.0
        %749 = vmatpush2.xpose.msra.mxu0 0.0
        %750 = vmatprep.subr.mxu0 0.0
        %751 = vmatpush2.xpose.msra.mxu0 0.0
        %752 = vmatprep.subr.mxu0 0.0
        %753 = vmatpush2.xpose.msra.mxu0 0.0
        %754 = vmatprep.subr.mxu0 0.0
        %755 = vmatpush2.xpose.msra.mxu0 0.0
        %756 = vmatprep.subr.mxu0 0.0
        %757 = vmatpush2.xpose.msra.mxu0 0.0
        %758 = vmatprep.subr.mxu0 0.0
        %759 = vmatpush2.xpose.msra.mxu0 0.0
        %760 = vmatprep.subr.mxu0 0.0
        %761 = vmatpush2.xpose.msra.mxu0 0.0
        %762 = vmatprep.subr.mxu0 0.0
        %763 = vmatpush2.xpose.msra.mxu0 0.0
        %764 = vmatprep.subr.mxu0 0.0
        %765 = vmatpush2.xpose.msra.mxu0 0.0
        %766 = vmatprep.subr.mxu0 0.0
        %767 = vmatpush2.xpose.msra.mxu0 0.0
        %768 = vmatprep.subr.mxu0 0.0
        %769 = vmatpush2.xpose.msra.mxu0 0.0
        %770 = vmatprep.subr.mxu0 0.0
        %771 = vmatpush2.xpose.msra.mxu0 0.0
        %772 = vmatprep.mubr.f32.mxu0 0.0
        %773 = vmatmul.mubr.f32.gmra.mxu0 %v704
        %v774 = vpop.f32.mrf.mxu0
        %v775 = vadd.f32 0.0, %v774
        %v776 = vpop.f32.mrf.mxu0
        %777 = vdwg.mxu0
        %v778 = vsel %vm535, %v775, -inf
        %v779 = vsel %vm615, %v778, -inf
        %780 = vmax.xlane.f32.xlu0 %v779
        %v781 = vpop.xlane.xlu0 %780
        %v782 = vsub.f32 %v778, %v781
        %v783 = vmul.f32 %v782, 1.442695
        %v784 = vpow.pop %v783
        %v785 = vsel %vm615, %v784, 0.0
        %786 = vadd.xlane.f32.xlu0 %v785
        %v787 = vpop.xlane.xlu0 %786
        %v788 = vrcp.pop %v787
        %v789 = vmul.f32 %v784, %v788
        %791 = vrot.lane.b32.xlu0 %v529, 112
        %v792 = vpop.permute.xlu0 %791
        %v795 = vsel %vm615, %v789, 0
        %797 = vmatprep.subr.mxu0 0.0
        %798 = vmatpush1.msra.mxu0 0.0
        %799 = vmatprep.subr.mxu0 0.0
        %800 = vmatpush1.msra.mxu0 0.0
        %801 = vmatprep.subr.mxu0 0.0
        %802 = vmatpush1.msra.mxu0 0.0
        %803 = vmatprep.subr.mxu0 0.0
        %804 = vmatpush1.msra.mxu0 0.0
        %805 = vmatprep.subr.mxu0 0.0
        %806 = vmatpush1.msra.mxu0 0.0
        %807 = vmatprep.subr.mxu0 0.0
        %808 = vmatpush1.msra.mxu0 0.0
        %809 = vmatprep.subr.mxu0 0.0
        %810 = vmatpush1.msra.mxu0 0.0
        %811 = vmatprep.subr.mxu0 0.0
        %812 = vmatpush1.msra.mxu0 0.0
        %813 = vmatprep.subr.mxu0 0.0
        %814 = vmatpush1.msra.mxu0 0.0
        %815 = vmatprep.subr.mxu0 0.0
        %816 = vmatpush1.msra.mxu0 0.0
        %817 = vmatprep.subr.mxu0 0.0
        %818 = vmatpush1.msra.mxu0 0.0
        %819 = vmatprep.subr.mxu0 0.0
        %820 = vmatpush1.msra.mxu0 0.0
        %821 = vmatprep.subr.mxu0 0.0
        %822 = vmatpush1.msra.mxu0 0.0
        %823 = vmatprep.subr.mxu0 0.0
        %824 = vmatpush1.msra.mxu0 0.0
        %825 = vmatprep.subr.mxu0 0.0
        %826 = vmatpush1.msra.mxu0 0.0
        %827 = vmatprep.subr.mxu0 0.0
        %828 = vmatpush1.msra.mxu0 %v792
        %829 = vmatprep.subr.mxu0 0.0
        %830 = vmatpush2.msra.mxu0 0.0
        %831 = vmatprep.subr.mxu0 0.0
        %832 = vmatpush2.msra.mxu0 0.0
        %833 = vmatprep.subr.mxu0 0.0
        %834 = vmatpush2.msra.mxu0 0.0
        %835 = vmatprep.subr.mxu0 0.0
        %836 = vmatpush2.msra.mxu0 0.0
        %837 = vmatprep.subr.mxu0 0.0
        %838 = vmatpush2.msra.mxu0 0.0
        %839 = vmatprep.subr.mxu0 0.0
        %840 = vmatpush2.msra.mxu0 0.0
        %841 = vmatprep.subr.mxu0 0.0
        %842 = vmatpush2.msra.mxu0 0.0
        %843 = vmatprep.subr.mxu0 0.0
        %844 = vmatpush2.msra.mxu0 0.0
        %845 = vmatprep.subr.mxu0 0.0
        %846 = vmatpush2.msra.mxu0 0.0
        %847 = vmatprep.subr.mxu0 0.0
        %848 = vmatpush2.msra.mxu0 0.0
        %849 = vmatprep.subr.mxu0 0.0
        %850 = vmatpush2.msra.mxu0 0.0
        %851 = vmatprep.subr.mxu0 0.0
        %852 = vmatpush2.msra.mxu0 0.0
        %853 = vmatprep.subr.mxu0 0.0
        %854 = vmatpush2.msra.mxu0 0.0
        %855 = vmatprep.subr.mxu0 0.0
        %856 = vmatpush2.msra.mxu0 0.0
        %857 = vmatprep.subr.mxu0 0.0
        %858 = vmatpush2.msra.mxu0 0.0
        %859 = vmatprep.subr.mxu0 0.0
        %860 = vmatpush2.msra.mxu0 0.0
        %861 = vmatprep.mubr.f32.mxu0 0.0
        %862 = vmatmul.mubr.f32.gmra.mxu0 %v795
        %v863 = vpop.f32.mrf.mxu0
        %v864 = vadd.f32 0.0, %v863
        %v865 = vpop.f32.mrf.mxu0
        %866 = vdwg.mxu0
        %867 = vrot.lane.b32.xlu0 %v527, 96
        %v868 = vpop.permute.xlu0 %867
        %869 = vrot.lane.b32.xlu0 %v527, 32
        %v870 = vpop.permute.xlu0 %869
        %v871 = vsel %vm539, %v868, 0
        %v873 = vsel %vm539, %v870, 0
        %875 = vmatprep.subr.mxu0 0.0
        %876 = vmatpush1.xpose.msra.mxu0 0.0
        %877 = vmatprep.subr.mxu0 0.0
        %878 = vmatpush1.xpose.msra.mxu0 0.0
        %879 = vmatprep.subr.mxu0 0.0
        %880 = vmatpush1.xpose.msra.mxu0 0.0
        %881 = vmatprep.subr.mxu0 0.0
        %882 = vmatpush1.xpose.msra.mxu0 0.0
        %883 = vmatprep.subr.mxu0 0.0
        %884 = vmatpush1.xpose.msra.mxu0 0.0
        %885 = vmatprep.subr.mxu0 0.0
        %886 = vmatpush1.xpose.msra.mxu0 0.0
        %887 = vmatprep.subr.mxu0 0.0
        %888 = vmatpush1.xpose.msra.mxu0 0.0
        %889 = vmatprep.subr.mxu0 0.0
        %890 = vmatpush1.xpose.msra.mxu0 0.0
        %891 = vmatprep.subr.mxu0 0.0
        %892 = vmatpush1.xpose.msra.mxu0 0.0
        %893 = vmatprep.subr.mxu0 0.0
        %894 = vmatpush1.xpose.msra.mxu0 0.0
        %895 = vmatprep.subr.mxu0 0.0
        %896 = vmatpush1.xpose.msra.mxu0 0.0
        %897 = vmatprep.subr.mxu0 0.0
        %898 = vmatpush1.xpose.msra.mxu0 0.0
        %899 = vmatprep.subr.mxu0 0.0
        %900 = vmatpush1.xpose.msra.mxu0 0.0
        %901 = vmatprep.subr.mxu0 0.0
        %902 = vmatpush1.xpose.msra.mxu0 0.0
        %903 = vmatprep.subr.mxu0 0.0
        %904 = vmatpush1.xpose.msra.mxu0 0.0
        %905 = vmatprep.subr.mxu0 0.0
        %906 = vmatpush1.xpose.msra.mxu0 %v873
        %907 = vmatprep.subr.mxu0 0.0
        %908 = vmatpush2.xpose.msra.mxu0 0.0
        %909 = vmatprep.subr.mxu0 0.0
        %910 = vmatpush2.xpose.msra.mxu0 0.0
        %911 = vmatprep.subr.mxu0 0.0
        %912 = vmatpush2.xpose.msra.mxu0 0.0
        %913 = vmatprep.subr.mxu0 0.0
        %914 = vmatpush2.xpose.msra.mxu0 0.0
        %915 = vmatprep.subr.mxu0 0.0
        %916 = vmatpush2.xpose.msra.mxu0 0.0
        %917 = vmatprep.subr.mxu0 0.0
        %918 = vmatpush2.xpose.msra.mxu0 0.0
        %919 = vmatprep.subr.mxu0 0.0
        %920 = vmatpush2.xpose.msra.mxu0 0.0
        %921 = vmatprep.subr.mxu0 0.0
        %922 = vmatpush2.xpose.msra.mxu0 0.0
        %923 = vmatprep.subr.mxu0 0.0
        %924 = vmatpush2.xpose.msra.mxu0 0.0
        %925 = vmatprep.subr.mxu0 0.0
        %926 = vmatpush2.xpose.msra.mxu0 0.0
        %927 = vmatprep.subr.mxu0 0.0
        %928 = vmatpush2.xpose.msra.mxu0 0.0
        %929 = vmatprep.subr.mxu0 0.0
        %930 = vmatpush2.xpose.msra.mxu0 0.0
        %931 = vmatprep.subr.mxu0 0.0
        %932 = vmatpush2.xpose.msra.mxu0 0.0
        %933 = vmatprep.subr.mxu0 0.0
        %934 = vmatpush2.xpose.msra.mxu0 0.0
        %935 = vmatprep.subr.mxu0 0.0
        %936 = vmatpush2.xpose.msra.mxu0 0.0
        %937 = vmatprep.subr.mxu0 0.0
        %938 = vmatpush2.xpose.msra.mxu0 0.0
        %939 = vmatprep.mubr.f32.mxu0 0.0
        %940 = vmatmul.mubr.f32.gmra.mxu0 %v871
        %v941 = vpop.f32.mrf.mxu0
        %v942 = vadd.f32 0.0, %v941
        %v943 = vpop.f32.mrf.mxu0
        %944 = vdwg.mxu0
        %v945 = vsel %vm535, %v942, -inf
        %v946 = vsel %vm615, %v945, -inf
        %947 = vmax.xlane.f32.xlu0 %v946
        %v948 = vpop.xlane.xlu0 %947
        %v949 = vsub.f32 %v945, %v948
        %v950 = vmul.f32 %v949, 1.442695
        %v951 = vpow.pop %v950
        %v952 = vsel %vm615, %v951, 0.0
        %953 = vadd.xlane.f32.xlu0 %v952
        %v954 = vpop.xlane.xlu0 %953
        %v955 = vrcp.pop %v954
        %v956 = vmul.f32 %v951, %v955
        %957 = vrot.lane.b32.xlu0 %v529, 96
        %v958 = vpop.permute.xlu0 %957
        %v961 = vsel %vm615, %v956, 0
        %963 = vmatprep.subr.mxu0 0.0
        %964 = vmatpush1.msra.mxu0 0.0
        %965 = vmatprep.subr.mxu0 0.0
        %966 = vmatpush1.msra.mxu0 0.0
        %967 = vmatprep.subr.mxu0 0.0
        %968 = vmatpush1.msra.mxu0 0.0
        %969 = vmatprep.subr.mxu0 0.0
        %970 = vmatpush1.msra.mxu0 0.0
        %971 = vmatprep.subr.mxu0 0.0
        %972 = vmatpush1.msra.mxu0 0.0
        %973 = vmatprep.subr.mxu0 0.0
        %974 = vmatpush1.msra.mxu0 0.0
        %975 = vmatprep.subr.mxu0 0.0
        %976 = vmatpush1.msra.mxu0 0.0
        %977 = vmatprep.subr.mxu0 0.0
        %978 = vmatpush1.msra.mxu0 0.0
        %979 = vmatprep.subr.mxu0 0.0
        %980 = vmatpush1.msra.mxu0 0.0
        %981 = vmatprep.subr.mxu0 0.0
        %982 = vmatpush1.msra.mxu0 0.0
        %983 = vmatprep.subr.mxu0 0.0
        %984 = vmatpush1.msra.mxu0 0.0
        %985 = vmatprep.subr.mxu0 0.0
        %986 = vmatpush1.msra.mxu0 0.0
        %987 = vmatprep.subr.mxu0 0.0
        %988 = vmatpush1.msra.mxu0 0.0
        %989 = vmatprep.subr.mxu0 0.0
        %990 = vmatpush1.msra.mxu0 0.0
        %991 = vmatprep.subr.mxu0 0.0
        %992 = vmatpush1.msra.mxu0 0.0
        %993 = vmatprep.subr.mxu0 0.0
        %994 = vmatpush1.msra.mxu0 %v958
        %995 = vmatprep.subr.mxu0 0.0
        %996 = vmatpush2.msra.mxu0 0.0
        %997 = vmatprep.subr.mxu0 0.0
        %998 = vmatpush2.msra.mxu0 0.0
        %999 = vmatprep.subr.mxu0 0.0
        %1000 = vmatpush2.msra.mxu0 0.0
        %1001 = vmatprep.subr.mxu0 0.0
        %1002 = vmatpush2.msra.mxu0 0.0
        %1003 = vmatprep.subr.mxu0 0.0
        %1004 = vmatpush2.msra.mxu0 0.0
        %1005 = vmatprep.subr.mxu0 0.0
        %1006 = vmatpush2.msra.mxu0 0.0
        %1007 = vmatprep.subr.mxu0 0.0
        %1008 = vmatpush2.msra.mxu0 0.0
        %1009 = vmatprep.subr.mxu0 0.0
        %1010 = vmatpush2.msra.mxu0 0.0
        %1011 = vmatprep.subr.mxu0 0.0
        %1012 = vmatpush2.msra.mxu0 0.0
        %1013 = vmatprep.subr.mxu0 0.0
        %1014 = vmatpush2.msra.mxu0 0.0
        %1015 = vmatprep.subr.mxu0 0.0
        %1016 = vmatpush2.msra.mxu0 0.0
        %1017 = vmatprep.subr.mxu0 0.0
        %1018 = vmatpush2.msra.mxu0 0.0
        %1019 = vmatprep.subr.mxu0 0.0
        %1020 = vmatpush2.msra.mxu0 0.0
        %1021 = vmatprep.subr.mxu0 0.0
        %1022 = vmatpush2.msra.mxu0 0.0
        %1023 = vmatprep.subr.mxu0 0.0
        %1024 = vmatpush2.msra.mxu0 0.0
        %1025 = vmatprep.subr.mxu0 0.0
        %1026 = vmatpush2.msra.mxu0 0.0
        %1027 = vmatprep.mubr.f32.mxu0 0.0
        %1028 = vmatmul.mubr.f32.gmra.mxu0 %v961
        %v1029 = vpop.f32.mrf.mxu0
        %v1030 = vadd.f32 0.0, %v1029
        %v1031 = vpop.f32.mrf.mxu0
        %1032 = vdwg.mxu0
        %1033 = vrot.lane.b32.xlu0 %v527, 80
        %v1034 = vpop.permute.xlu0 %1033
        %1035 = vrot.lane.b32.xlu0 %v527, 16
        %v1036 = vpop.permute.xlu0 %1035
        %v1037 = vsel %vm539, %v1034, 0
        %v1039 = vsel %vm539, %v1036, 0
        %1041 = vmatprep.subr.mxu0 0.0
        %1042 = vmatpush1.xpose.msra.mxu0 0.0
        %1043 = vmatprep.subr.mxu0 0.0
        %1044 = vmatpush1.xpose.msra.mxu0 0.0
        %1045 = vmatprep.subr.mxu0 0.0
        %1046 = vmatpush1.xpose.msra.mxu0 0.0
        %1047 = vmatprep.subr.mxu0 0.0
        %1048 = vmatpush1.xpose.msra.mxu0 0.0
        %1049 = vmatprep.subr.mxu0 0.0
        %1050 = vmatpush1.xpose.msra.mxu0 0.0
        %1051 = vmatprep.subr.mxu0 0.0
        %1052 = vmatpush1.xpose.msra.mxu0 0.0
        %1053 = vmatprep.subr.mxu0 0.0
        %1054 = vmatpush1.xpose.msra.mxu0 0.0
        %1055 = vmatprep.subr.mxu0 0.0
        %1056 = vmatpush1.xpose.msra.mxu0 0.0
        %1057 = vmatprep.subr.mxu0 0.0
        %1058 = vmatpush1.xpose.msra.mxu0 0.0
        %1059 = vmatprep.subr.mxu0 0.0
        %1060 = vmatpush1.xpose.msra.mxu0 0.0
        %1061 = vmatprep.subr.mxu0 0.0
        %1062 = vmatpush1.xpose.msra.mxu0 0.0
        %1063 = vmatprep.subr.mxu0 0.0
        %1064 = vmatpush1.xpose.msra.mxu0 0.0
        %1065 = vmatprep.subr.mxu0 0.0
        %1066 = vmatpush1.xpose.msra.mxu0 0.0
        %1067 = vmatprep.subr.mxu0 0.0
        %1068 = vmatpush1.xpose.msra.mxu0 0.0
        %1069 = vmatprep.subr.mxu0 0.0
        %1070 = vmatpush1.xpose.msra.mxu0 0.0
        %1071 = vmatprep.subr.mxu0 0.0
        %1072 = vmatpush1.xpose.msra.mxu0 %v1039
        %1073 = vmatprep.subr.mxu0 0.0
        %1074 = vmatpush2.xpose.msra.mxu0 0.0
        %1075 = vmatprep.subr.mxu0 0.0
        %1076 = vmatpush2.xpose.msra.mxu0 0.0
        %1077 = vmatprep.subr.mxu0 0.0
        %1078 = vmatpush2.xpose.msra.mxu0 0.0
        %1079 = vmatprep.subr.mxu0 0.0
        %1080 = vmatpush2.xpose.msra.mxu0 0.0
        %1081 = vmatprep.subr.mxu0 0.0
        %1082 = vmatpush2.xpose.msra.mxu0 0.0
        %1083 = vmatprep.subr.mxu0 0.0
        %1084 = vmatpush2.xpose.msra.mxu0 0.0
        %1085 = vmatprep.subr.mxu0 0.0
        %1086 = vmatpush2.xpose.msra.mxu0 0.0
        %1087 = vmatprep.subr.mxu0 0.0
        %1088 = vmatpush2.xpose.msra.mxu0 0.0
        %1089 = vmatprep.subr.mxu0 0.0
        %1090 = vmatpush2.xpose.msra.mxu0 0.0
        %1091 = vmatprep.subr.mxu0 0.0
        %1092 = vmatpush2.xpose.msra.mxu0 0.0
        %1093 = vmatprep.subr.mxu0 0.0
        %1094 = vmatpush2.xpose.msra.mxu0 0.0
        %1095 = vmatprep.subr.mxu0 0.0
        %1096 = vmatpush2.xpose.msra.mxu0 0.0
        %1097 = vmatprep.subr.mxu0 0.0
        %1098 = vmatpush2.xpose.msra.mxu0 0.0
        %1099 = vmatprep.subr.mxu0 0.0
        %1100 = vmatpush2.xpose.msra.mxu0 0.0
        %1101 = vmatprep.subr.mxu0 0.0
        %1102 = vmatpush2.xpose.msra.mxu0 0.0
        %1103 = vmatprep.subr.mxu0 0.0
        %1104 = vmatpush2.xpose.msra.mxu0 0.0
        %1105 = vmatprep.mubr.f32.mxu0 0.0
        %1106 = vmatmul.mubr.f32.gmra.mxu0 %v1037
        %v1107 = vpop.f32.mrf.mxu0
        %v1108 = vadd.f32 0.0, %v1107
        %v1109 = vpop.f32.mrf.mxu0
        %1110 = vdwg.mxu0
        %v1111 = vsel %vm535, %v1108, -inf
        %v1112 = vsel %vm615, %v1111, -inf
        %1113 = vmax.xlane.f32.xlu0 %v1112
        %v1114 = vpop.xlane.xlu0 %1113
        %v1115 = vsub.f32 %v1111, %v1114
        %v1116 = vmul.f32 %v1115, 1.442695
        %v1117 = vpow.pop %v1116
        %v1118 = vsel %vm615, %v1117, 0.0
        %1119 = vadd.xlane.f32.xlu0 %v1118
        %v1120 = vpop.xlane.xlu0 %1119
        %v1121 = vrcp.pop %v1120
        %v1122 = vmul.f32 %v1117, %v1121
        %1123 = vrot.lane.b32.xlu0 %v529, 80
        %v1124 = vpop.permute.xlu0 %1123
        %v1127 = vsel %vm615, %v1122, 0
        %1129 = vmatprep.subr.mxu0 0.0
        %1130 = vmatpush1.msra.mxu0 0.0
        %1131 = vmatprep.subr.mxu0 0.0
        %1132 = vmatpush1.msra.mxu0 0.0
        %1133 = vmatprep.subr.mxu0 0.0
        %1134 = vmatpush1.msra.mxu0 0.0
        %1135 = vmatprep.subr.mxu0 0.0
        %1136 = vmatpush1.msra.mxu0 0.0
        %1137 = vmatprep.subr.mxu0 0.0
        %1138 = vmatpush1.msra.mxu0 0.0
        %1139 = vmatprep.subr.mxu0 0.0
        %1140 = vmatpush1.msra.mxu0 0.0
        %1141 = vmatprep.subr.mxu0 0.0
        %1142 = vmatpush1.msra.mxu0 0.0
        %1143 = vmatprep.subr.mxu0 0.0
        %1144 = vmatpush1.msra.mxu0 0.0
        %1145 = vmatprep.subr.mxu0 0.0
        %1146 = vmatpush1.msra.mxu0 0.0
        %1147 = vmatprep.subr.mxu0 0.0
        %1148 = vmatpush1.msra.mxu0 0.0
        %1149 = vmatprep.subr.mxu0 0.0
        %1150 = vmatpush1.msra.mxu0 0.0
        %1151 = vmatprep.subr.mxu0 0.0
        %1152 = vmatpush1.msra.mxu0 0.0
        %1153 = vmatprep.subr.mxu0 0.0
        %1154 = vmatpush1.msra.mxu0 0.0
        %1155 = vmatprep.subr.mxu0 0.0
        %1156 = vmatpush1.msra.mxu0 0.0
        %1157 = vmatprep.subr.mxu0 0.0
        %1158 = vmatpush1.msra.mxu0 0.0
        %1159 = vmatprep.subr.mxu0 0.0
        %1160 = vmatpush1.msra.mxu0 %v1124
        %1161 = vmatprep.subr.mxu0 0.0
        %1162 = vmatpush2.msra.mxu0 0.0
        %1163 = vmatprep.subr.mxu0 0.0
        %1164 = vmatpush2.msra.mxu0 0.0
        %1165 = vmatprep.subr.mxu0 0.0
        %1166 = vmatpush2.msra.mxu0 0.0
        %1167 = vmatprep.subr.mxu0 0.0
        %1168 = vmatpush2.msra.mxu0 0.0
        %1169 = vmatprep.subr.mxu0 0.0
        %1170 = vmatpush2.msra.mxu0 0.0
        %1171 = vmatprep.subr.mxu0 0.0
        %1172 = vmatpush2.msra.mxu0 0.0
        %1173 = vmatprep.subr.mxu0 0.0
        %1174 = vmatpush2.msra.mxu0 0.0
        %1175 = vmatprep.subr.mxu0 0.0
        %1176 = vmatpush2.msra.mxu0 0.0
        %1177 = vmatprep.subr.mxu0 0.0
        %1178 = vmatpush2.msra.mxu0 0.0
        %1179 = vmatprep.subr.mxu0 0.0
        %1180 = vmatpush2.msra.mxu0 0.0
        %1181 = vmatprep.subr.mxu0 0.0
        %1182 = vmatpush2.msra.mxu0 0.0
        %1183 = vmatprep.subr.mxu0 0.0
        %1184 = vmatpush2.msra.mxu0 0.0
        %1185 = vmatprep.subr.mxu0 0.0
        %1186 = vmatpush2.msra.mxu0 0.0
        %1187 = vmatprep.subr.mxu0 0.0
        %1188 = vmatpush2.msra.mxu0 0.0
        %1189 = vmatprep.subr.mxu0 0.0
        %1190 = vmatpush2.msra.mxu0 0.0
        %1191 = vmatprep.subr.mxu0 0.0
        %1192 = vmatpush2.msra.mxu0 0.0
        %1193 = vmatprep.mubr.f32.mxu0 0.0
        %1194 = vmatmul.mubr.f32.gmra.mxu0 %v1127
        %v1195 = vpop.f32.mrf.mxu0
        %v1196 = vadd.f32 0.0, %v1195
        %v1197 = vpop.f32.mrf.mxu0
        %1198 = vdwg.mxu0
        %1200 = vrot.lane.b32.xlu0 %v864, 16
        %v1201 = vpop.permute.xlu0 %1200
        %1204 = vrot.lane.b32.xlu0 %v1030, 32
        %v1205 = vpop.permute.xlu0 %1204
        %1208 = vrot.lane.b32.xlu0 %v1196, 48
        %v1209 = vpop.permute.xlu0 %1208
        %v1211 = vsel %vm539, %v697, %v1201
        %vm1212 = vcmask 261120
        %v1213 = vsel %vm1212, %v1211, %v1205
        %vm1214 = vcmask 392192
        %v1215 = vsel %vm1214, %v1213, %v1209
        %v1216 = vld [vmem:[%s4] sm:$0xff]
        %v1217 = vld [vmem:[%s4 + $0x8] sm:$0xff]
        %v1218 = vld [vmem:[%s4 + $0x10] sm:$0xff]
        %v1219 = vld [vmem:[%s4 + $0x18] sm:$0xff]
        %v1220 = vld [vmem:[%s4 + $0x20] sm:$0xff]
        %v1221 = vld [vmem:[%s4 + $0x28] sm:$0xff]
        %v1222 = vld [vmem:[%s4 + $0x30] sm:$0xff]
        %v1223 = vld [vmem:[%s4 + $0x38] sm:$0xff]
        %v1224 = vld [vmem:[%s5] sm:$0x1]
        %v1226 = vlaneseq
        %v1227 = vshrl.u32 %v1226, 7
        %v1228 = vsub.s32 0, %v1227
        %v1229 = vrot.slane %v1224, %v1228
        %v1232 = vsel %vm412, %v1215, 0
        %1234 = vmatprep.subr.mxu0 0.0
        %1235 = vmatpush1.msra.mxu0 0.0
        %1236 = vmatprep.subr.mxu0 0.0
        %1237 = vmatpush1.msra.mxu0 0.0
        %1238 = vmatprep.subr.mxu0 0.0
        %1239 = vmatpush1.msra.mxu0 0.0
        %1240 = vmatprep.subr.mxu0 0.0
        %1241 = vmatpush1.msra.mxu0 0.0
        %1242 = vmatprep.subr.mxu0 0.0
        %1243 = vmatpush1.msra.mxu0 0.0
        %1244 = vmatprep.subr.mxu0 0.0
        %1245 = vmatpush1.msra.mxu0 0.0
        %1246 = vmatprep.subr.mxu0 0.0
        %1247 = vmatpush1.msra.mxu0 0.0
        %1248 = vmatprep.subr.mxu0 0.0
        %1249 = vmatpush1.msra.mxu0 0.0
        %1250 = vmatprep.subr.mxu0 0.0
        %1251 = vmatpush1.msra.mxu0 %v1223
        %1252 = vmatprep.subr.mxu0 0.0
        %1253 = vmatpush1.msra.mxu0 %v1222
        %1254 = vmatprep.subr.mxu0 0.0
        %1255 = vmatpush1.msra.mxu0 %v1221
        %1256 = vmatprep.subr.mxu0 0.0
        %1257 = vmatpush1.msra.mxu0 %v1220
        %1258 = vmatprep.subr.mxu0 0.0
        %1259 = vmatpush1.msra.mxu0 %v1219
        %1260 = vmatprep.subr.mxu0 0.0
        %1261 = vmatpush1.msra.mxu0 %v1218
        %1262 = vmatprep.subr.mxu0 0.0
        %1263 = vmatpush1.msra.mxu0 %v1217
        %1264 = vmatprep.subr.mxu0 0.0
        %1265 = vmatpush1.msra.mxu0 %v1216
        %1266 = vmatprep.subr.mxu0 0.0
        %1267 = vmatpush2.msra.mxu0 0.0
        %1268 = vmatprep.subr.mxu0 0.0
        %1269 = vmatpush2.msra.mxu0 0.0
        %1270 = vmatprep.subr.mxu0 0.0
        %1271 = vmatpush2.msra.mxu0 0.0
        %1272 = vmatprep.subr.mxu0 0.0
        %1273 = vmatpush2.msra.mxu0 0.0
        %1274 = vmatprep.subr.mxu0 0.0
        %1275 = vmatpush2.msra.mxu0 0.0
        %1276 = vmatprep.subr.mxu0 0.0
        %1277 = vmatpush2.msra.mxu0 0.0
        %1278 = vmatprep.subr.mxu0 0.0
        %1279 = vmatpush2.msra.mxu0 0.0
        %1280 = vmatprep.subr.mxu0 0.0
        %1281 = vmatpush2.msra.mxu0 0.0
        %1282 = vmatprep.subr.mxu0 0.0
        %1283 = vmatpush2.msra.mxu0 0.0
        %1284 = vmatprep.subr.mxu0 0.0
        %1285 = vmatpush2.msra.mxu0 0.0
        %1286 = vmatprep.subr.mxu0 0.0
        %1287 = vmatpush2.msra.mxu0 0.0
        %1288 = vmatprep.subr.mxu0 0.0
        %1289 = vmatpush2.msra.mxu0 0.0
        %1290 = vmatprep.subr.mxu0 0.0
        %1291 = vmatpush2.msra.mxu0 0.0
        %1292 = vmatprep.subr.mxu0 0.0
        %1293 = vmatpush2.msra.mxu0 0.0
        %1294 = vmatprep.subr.mxu0 0.0
        %1295 = vmatpush2.msra.mxu0 0.0
        %1296 = vmatprep.subr.mxu0 0.0
        %1297 = vmatpush2.msra.mxu0 0.0
        %1298 = vmatprep.mubr.f32.mxu0 0.0
        %1299 = vmatmul.mubr.f32.gmra.mxu0 %v1232
        %v1300 = vpop.f32.mrf.mxu0
        %v1301 = vadd.f32 %v1229, %v1300
        %v1302 = vpop.f32.mrf.mxu0
        %1303 = vdwg.mxu0
        %v1304 = vadd.f32 %v409, %v1301
        %v1305 = vld [vmem:[%s6] sm:$0x1]
        %v1306 = vld [vmem:[%s7] sm:$0x1]
        %v1307 = vsel %vm412, %v1304, 0.0
        %1308 = vadd.xlane.f32.xlu0 %v1307
        %v1309 = vpop.xlane.xlu0 %1308
        %v1310 = vmul.f32 %v1309, %v416
        %v1311 = vsub.f32 %v1304, %v1310
        %v1312 = vmul.f32 %v1311, %v1311
        %v1313 = vsel %vm412, %v1312, 0.0
        %1314 = vadd.xlane.f32.xlu0 %v1313
        %v1315 = vpop.xlane.xlu0 %1314
        %v1316 = vmul.f32 %v1315, %v416
        %v1317 = vadd.f32 %v1316, 1e-05
        %v1318 = vrsqrt.pop %v1317
        %v1319 = vmul.f32 %v1311, %v1318
        %v1321 = vlaneseq
        %v1322 = vshrl.u32 %v1321, 7
        %v1323 = vsub.s32 0, %v1322
        %v1324 = vrot.slane %v1305, %v1323
        %v1326 = vmul.f32 %v1319, %v1324
        %v1328 = vlaneseq
        %v1329 = vshrl.u32 %v1328, 7
        %v1330 = vsub.s32 0, %v1329
        %v1331 = vrot.slane %v1306, %v1330
        %v1333 = vadd.f32 %v1326, %v1331
        %v1334 = vld [vmem:[%s8] sm:$0xff]
        %v1335 = vld [vmem:[%s8 + $0x8] sm:$0xff]
        %v1336 = vld [vmem:[%s8 + $0x10] sm:$0xff]
        %v1337 = vld [vmem:[%s8 + $0x18] sm:$0xff]
        %v1338 = vld [vmem:[%s8 + $0x20] sm:$0xff]
        %v1339 = vld [vmem:[%s8 + $0x28] sm:$0xff]
        %v1340 = vld [vmem:[%s8 + $0x30] sm:$0xff]
        %v1341 = vld [vmem:[%s8 + $0x38] sm:$0xff]
        %v1342 = vld [vmem:[%s8 + $0x40] sm:$0xff]
        %v1343 = vld [vmem:[%s8 + $0x48] sm:$0xff]
        %v1344 = vld [vmem:[%s8 + $0x50] sm:$0xff]
        %v1345 = vld [vmem:[%s8 + $0x58] sm:$0xff]
        %v1346 = vld [vmem:[%s8 + $0x60] sm:$0xff]
        %v1347 = vld [vmem:[%s8 + $0x68] sm:$0xff]
        %v1348 = vld [vmem:[%s8 + $0x70] sm:$0xff]
        %v1349 = vld [vmem:[%s8 + $0x78] sm:$0xff]
        %v1350 = vld [vmem:[%s9] sm:$0x3]
        %v1352 = vlaneseq
        %v1353 = vshrl.u32 %v1352, 7
        %v1354 = vsub.s32 0, %v1353
        %v1355 = vrot.slane %v1350, %v1354
        %v1356 = vlaneseq
        %v1357 = vshrl.u32 %v1356, 7
        %v1358 = vsub.s32 1, %v1357
        %v1359 = vrot.slane %v1350, %v1358
        %v1363 = vsel %vm412, %v1333, 0
        %1365 = vmatprep.subr.mxu0 0.0
        %1366 = vmatpush1.msra.mxu0 0.0
        %1367 = vmatprep.subr.mxu0 0.0
        %1368 = vmatpush1.msra.mxu0 0.0
        %1369 = vmatprep.subr.mxu0 0.0
        %1370 = vmatpush1.msra.mxu0 0.0
        %1371 = vmatprep.subr.mxu0 0.0
        %1372 = vmatpush1.msra.mxu0 0.0
        %1373 = vmatprep.subr.mxu0 0.0
        %1374 = vmatpush1.msra.mxu0 0.0
        %1375 = vmatprep.subr.mxu0 0.0
        %1376 = vmatpush1.msra.mxu0 0.0
        %1377 = vmatprep.subr.mxu0 0.0
        %1378 = vmatpush1.msra.mxu0 0.0
        %1379 = vmatprep.subr.mxu0 0.0
        %1380 = vmatpush1.msra.mxu0 0.0
        %1381 = vmatprep.subr.mxu0 %v1349
        %1382 = vmatpush1.msra.mxu0 %v1348
        %1383 = vmatprep.subr.mxu0 %v1347
        %1384 = vmatpush1.msra.mxu0 %v1346
        %1385 = vmatprep.subr.mxu0 %v1345
        %1386 = vmatpush1.msra.mxu0 %v1344
        %1387 = vmatprep.subr.mxu0 %v1343
        %1388 = vmatpush1.msra.mxu0 %v1342
        %1389 = vmatprep.subr.mxu0 %v1341
        %1390 = vmatpush1.msra.mxu0 %v1340
        %1391 = vmatprep.subr.mxu0 %v1339
        %1392 = vmatpush1.msra.mxu0 %v1338
        %1393 = vmatprep.subr.mxu0 %v1337
        %1394 = vmatpush1.msra.mxu0 %v1336
        %1395 = vmatprep.subr.mxu0 %v1335
        %1396 = vmatpush1.msra.mxu0 %v1334
        %1397 = vmatprep.subr.mxu0 0.0
        %1398 = vmatpush2.msra.mxu0 0.0
        %1399 = vmatprep.subr.mxu0 0.0
        %1400 = vmatpush2.msra.mxu0 0.0
        %1401 = vmatprep.subr.mxu0 0.0
        %1402 = vmatpush2.msra.mxu0 0.0
        %1403 = vmatprep.subr.mxu0 0.0
        %1404 = vmatpush2.msra.mxu0 0.0
        %1405 = vmatprep.subr.mxu0 0.0
        %1406 = vmatpush2.msra.mxu0 0.0
        %1407 = vmatprep.subr.mxu0 0.0
        %1408 = vmatpush2.msra.mxu0 0.0
        %1409 = vmatprep.subr.mxu0 0.0
        %1410 = vmatpush2.msra.mxu0 0.0
        %1411 = vmatprep.subr.mxu0 0.0
        %1412 = vmatpush2.msra.mxu0 0.0
        %1413 = vmatprep.subr.mxu0 0.0
        %1414 = vmatpush2.msra.mxu0 0.0
        %1415 = vmatprep.subr.mxu0 0.0
        %1416 = vmatpush2.msra.mxu0 0.0
        %1417 = vmatprep.subr.mxu0 0.0
        %1418 = vmatpush2.msra.mxu0 0.0
        %1419 = vmatprep.subr.mxu0 0.0
        %1420 = vmatpush2.msra.mxu0 0.0
        %1421 = vmatprep.subr.mxu0 0.0
        %1422 = vmatpush2.msra.mxu0 0.0
        %1423 = vmatprep.subr.mxu0 0.0
        %1424 = vmatpush2.msra.mxu0 0.0
        %1425 = vmatprep.subr.mxu0 0.0
        %1426 = vmatpush2.msra.mxu0 0.0
        %1427 = vmatprep.subr.mxu0 0.0
        %1428 = vmatpush2.msra.mxu0 0.0
        %1429 = vmatprep.mubr.f32.mxu0 0.0
        %1430 = vmatmul.mubr.f32.gmra.mxu0 %v1363
        %v1431 = vpop.f32.mrf.mxu0
        %v1432 = vadd.f32 %v1355, %v1431
        %v1433 = vpop.f32.mrf.mxu0
        %v1434 = vadd.f32 %v1359, %v1433
        %1435 = vdwg.mxu0
        %v1436 = vmax.f32 %v1432, 0.0
        %v1437 = vmax.f32 %v1434, 0.0
        %v1438 = vld [vmem:[%s10] sm:$0xff]
        %v1439 = vld [vmem:[%s10 + $0x8] sm:$0xff]
        %v1440 = vld [vmem:[%s10 + $0x10] sm:$0xff]
        %v1441 = vld [vmem:[%s10 + $0x18] sm:$0xff]
        %v1442 = vld [vmem:[%s10 + $0x20] sm:$0xff]
        %v1443 = vld [vmem:[%s10 + $0x28] sm:$0xff]
        %v1444 = vld [vmem:[%s10 + $0x30] sm:$0xff]
        %v1445 = vld [vmem:[%s10 + $0x38] sm:$0xff]
        %v1446 = vld [vmem:[%s10 + $0x40] sm:$0xff]
        %v1447 = vld [vmem:[%s10 + $0x48] sm:$0xff]
        %v1448 = vld [vmem:[%s10 + $0x50] sm:$0xff]
        %v1449 = vld [vmem:[%s10 + $0x58] sm:$0xff]
        %v1450 = vld [vmem:[%s10 + $0x60] sm:$0xff]
        %v1451 = vld [vmem:[%s10 + $0x68] sm:$0xff]
        %v1452 = vld [vmem:[%s10 + $0x70] sm:$0xff]
        %v1453 = vld [vmem:[%s10 + $0x78] sm:$0xff]
        %v1454 = vld [vmem:[%s10 + $0x80] sm:$0xff]
        %v1455 = vld [vmem:[%s10 + $0x88] sm:$0xff]
        %v1456 = vld [vmem:[%s10 + $0x90] sm:$0xff]
        %v1457 = vld [vmem:[%s10 + $0x98] sm:$0xff]
        %v1458 = vld [vmem:[%s10 + $0xa0] sm:$0xff]
        %v1459 = vld [vmem:[%s10 + $0xa8] sm:$0xff]
        %v1460 = vld [vmem:[%s10 + $0xb0] sm:$0xff]
        %v1461 = vld [vmem:[%s10 + $0xb8] sm:$0xff]
        %v1462 = vld [vmem:[%s10 + $0xc0] sm:$0xff]
        %v1463 = vld [vmem:[%s10 + $0xc8] sm:$0xff]
        %v1464 = vld [vmem:[%s10 + $0xd0] sm:$0xff]
        %v1465 = vld [vmem:[%s10 + $0xd8] sm:$0xff]
        %v1466 = vld [vmem:[%s10 + $0xe0] sm:$0xff]
        %v1467 = vld [vmem:[%s10 + $0xe8] sm:$0xff]
        %v1468 = vld [vmem:[%s10 + $0xf0] sm:$0xff]
        %v1469 = vld [vmem:[%s10 + $0xf8] sm:$0xff]
        %v1470 = vld [vmem:[%s11] sm:$0x1]
        %v1472 = vlaneseq
        %v1473 = vshrl.u32 %v1472, 7
        %v1474 = vsub.s32 0, %v1473
        %v1475 = vrot.slane %v1470, %v1474
        %1477 = vmatprep.subr.mxu0 0.0
        %1478 = vmatpush1.msra.mxu0 %v1453
        %1479 = vmatprep.subr.mxu0 0.0
        %1480 = vmatpush1.msra.mxu0 %v1452
        %1481 = vmatprep.subr.mxu0 0.0
        %1482 = vmatpush1.msra.mxu0 %v1451
        %1483 = vmatprep.subr.mxu0 0.0
        %1484 = vmatpush1.msra.mxu0 %v1450
        %1485 = vmatprep.subr.mxu0 0.0
        %1486 = vmatpush1.msra.mxu0 %v1449
        %1487 = vmatprep.subr.mxu0 0.0
        %1488 = vmatpush1.msra.mxu0 %v1448
        %1489 = vmatprep.subr.mxu0 0.0
        %1490 = vmatpush1.msra.mxu0 %v1447
        %1491 = vmatprep.subr.mxu0 0.0
        %1492 = vmatpush1.msra.mxu0 %v1446
        %1493 = vmatprep.subr.mxu0 0.0
        %1494 = vmatpush1.msra.mxu0 %v1445
        %1495 = vmatprep.subr.mxu0 0.0
        %1496 = vmatpush1.msra.mxu0 %v1444
        %1497 = vmatprep.subr.mxu0 0.0
        %1498 = vmatpush1.msra.mxu0 %v1443
        %1499 = vmatprep.subr.mxu0 0.0
        %1500 = vmatpush1.msra.mxu0 %v1442
        %1501 = vmatprep.subr.mxu0 0.0
        %1502 = vmatpush1.msra.mxu0 %v1441
        %1503 = vmatprep.subr.mxu0 0.0
        %1504 = vmatpush1.msra.mxu0 %v1440
        %1505 = vmatprep.subr.mxu0 0.0
        %1506 = vmatpush1.msra.mxu0 %v1439
        %1507 = vmatprep.subr.mxu0 0.0
        %1508 = vmatpush1.msra.mxu0 %v1438
        %1509 = vmatprep.subr.mxu0 0.0
        %1510 = vmatpush2.msra.mxu0 %v1469
        %1511 = vmatprep.subr.mxu0 0.0
        %1512 = vmatpush2.msra.mxu0 %v1468
        %1513 = vmatprep.subr.mxu0 0.0
        %1514 = vmatpush2.msra.mxu0 %v1467
        %1515 = vmatprep.subr.mxu0 0.0
        %1516 = vmatpush2.msra.mxu0 %v1466
        %1517 = vmatprep.subr.mxu0 0.0
        %1518 = vmatpush2.msra.mxu0 %v1465
        %1519 = vmatprep.subr.mxu0 0.0
        %1520 = vmatpush2.msra.mxu0 %v1464
        %1521 = vmatprep.subr.mxu0 0.0
        %1522 = vmatpush2.msra.mxu0 %v1463
        %1523 = vmatprep.subr.mxu0 0.0
        %1524 = vmatpush2.msra.mxu0 %v1462
        %1525 = vmatprep.subr.mxu0 0.0
        %1526 = vmatpush2.msra.mxu0 %v1461
        %1527 = vmatprep.subr.mxu0 0.0
        %1528 = vmatpush2.msra.mxu0 %v1460
        %1529 = vmatprep.subr.mxu0 0.0
        %1530 = vmatpush2.msra.mxu0 %v1459
        %1531 = vmatprep.subr.mxu0 0.0
        %1532 = vmatpush2.msra.mxu0 %v1458
        %1533 = vmatprep.subr.mxu0 0.0
        %1534 = vmatpush2.msra.mxu0 %v1457
        %1535 = vmatprep.subr.mxu0 0.0
        %1536 = vmatpush2.msra.mxu0 %v1456
        %1537 = vmatprep.subr.mxu0 0.0
        %1538 = vmatpush2.msra.mxu0 %v1455
        %1539 = vmatprep.subr.mxu0 0.0
        %1540 = vmatpush2.msra.mxu0 %v1454
        %1541 = vmatprep.mubr.f32.mxu0 %v1437
        %1542 = vmatmul.mubr.f32.gmra.mxu0 %v1436
        %v1543 = vpop.f32.mrf.mxu0
        %v1544 = vadd.f32 %v1475, %v1543
        %v1545 = vpop.f32.mrf.mxu0
        %1546 = vdwg.mxu0
        %v1547 = vadd.f32 %v1304, %v1544
        %1548 = vst.msk [vmem:[%s404] sm:$0xff] %vm412, %v1547
        %s1549 = sand.u32 %s291, 1
        %s1550 = scalar_lea.sflag [#allocation3], %s1549
        %s1551 = sand.u32 %s291, 1
        %s1552 = smul.addr %s1551, 8
        %s1553 = scalar_lea.vmem [#allocation2], %s1552
        // Predicated region
        $region69: #{tpu_custom_call.1} parent=67 // pred_check
          %p1554 = pneg %p301
        $region70: #{tpu_custom_call.1} parent=67 // pred_check_branch
          %1556 = sbr.rel (%p1554) target = $region72
        $region71: #{tpu_custom_call.1} parent=67 // pred_region
          %s1558 = ssub.s32 128, 128
          %1559 = vsyncadd %s1550, %s1558
          %s1560 = smul.addr %s26, 128
          %s1561 = scalar_lea.hbm %s12, %s1560
          %s1563 = sshll.u32 %s1553, 4
          %s1564 = int_to_ptr.vmem [resolvable:$true] %s1563
          %1566 = dma.vmem_to_hbm [thread:$0]  %s1564, 128, %s1561, %s1550
        $region72: #{tpu_custom_call.1} parent=67 // pred_fallthru
          _
      $region68: #{tpu_custom_call.1} parent=5 // pred_fallthru
        _
      %p1567 = scmp.le.s32.totalorder 2, %s21
      // Predicated region
      $region73: #{tpu_custom_call.1} parent=5 // pred_check
        %p1568 = pneg %p1567
      $region74: #{tpu_custom_call.1} parent=5 // pred_check_branch
        %1570 = sbr.rel (%p1568) target = $region76
      $region75: #{tpu_custom_call.1} parent=5 // pred_region
        %s1571 = ssub.s32 %s21, 2
        // Predicated region
        $region77: #{tpu_custom_call.1} parent=75 // pred_check
          %p1572 = pneg %p307
        $region78: #{tpu_custom_call.1} parent=75 // pred_check_branch
          %1574 = sbr.rel (%p1572) target = $region80
        $region79: #{tpu_custom_call.1} parent=75 // pred_region
          %s1575 = sand.u32 %s292, 1
          %s1576 = scalar_lea.sflag [#allocation3], %s1575
          %s1577 = sand.u32 %s292, 1
          %s1578 = smul.addr %s1577, 8
          %s1579 = scalar_lea.vmem [#allocation2], %s1578
          %1580 = dma.done %s1576, 128
        $region80: #{tpu_custom_call.1} parent=75 // pred_fallthru
          _
      $region76: #{tpu_custom_call.1} parent=5 // pred_fallthru
        _
    $region6: #{tpu_custom_call.1} parent=1 // loop_footer
      %s25 = sadd.s32 1, %s21
    $region7: #{tpu_custom_call.1} parent=1 // loop_footer_branch
      %20 = sbr.rel target = $region3
    $region8: #{tpu_custom_call.1} parent=1 // loop_exit
      _
    %1581 = vsyncpa [#allocation3], 1
    %s1582 = scalar_lea.sflag [#allocation3], 1
    %1583 = vsyncpa %s1582, 1

</llo_original>
